<compile_context>
chip_gen: v5e
topology: v5e:2x2
jax: 0.10.0
libtpu: 0.0.40
codegen_flags: <defaults>
</compile_context>

<pallas_src>
import functools

import jax
import jax.numpy as jnp
from jax import lax
from jax.experimental import pallas as pl
from jax.experimental.pallas import tpu as pltpu

NEG_BIAS = -1e9                                    # additive mask bias (kernel)
NEG_INF = float(jnp.finfo(jnp.float32).min)        # reference mask fill


def _layernorm(x, g, b, eps):
    mu = jnp.mean(x, axis=-1, keepdims=True)
    var = jnp.mean((x - mu) ** 2, axis=-1, keepdims=True)
    return (x - mu) * lax.rsqrt(var + eps) * g + b


def _mha(q_in, kv_in, bias, wq, bq, wkv, bkv, wo, bo, n_heads):
    """Multi-head attention for one utterance.

    q_in: (N, D) f32; kv_in: (M, D) f32; bias: additive mask broadcastable to (N, M).
    wq:  (D, D)  bf16 (1/sqrt(d_k) folded in);  bq:  (1, D)  f32 (scale folded in).
    wkv: (D, 2D) bf16 ([Wk | Wv] fused);        bkv: (1, 2D) f32.
    wo:  (D, D)  bf16;                           bo:  (1, D)  f32.
    """
    N, D = q_in.shape
    d_k = D // n_heads

    # Fused, lane-dense projections with full-D contraction; f32 accumulate + bias,
    # then bf16 operands for the MXU score / context matmuls.
    q = jnp.dot(q_in.astype(jnp.bfloat16), wq,
                preferred_element_type=jnp.float32) + bq              # (N, D)
    kv = jnp.dot(kv_in.astype(jnp.bfloat16), wkv,
                 preferred_element_type=jnp.float32) + bkv            # (M, 2D)
    q = q.astype(jnp.bfloat16)
    kv = kv.astype(jnp.bfloat16)

    # Per-head scores / softmax / context (static unrolled loop; head = lane slice).
    ctx_heads = []
    for h in range(n_heads):
        q_h = q[:, h * d_k:(h + 1) * d_k]                             # (N, d_k)
        k_h = kv[:, h * d_k:(h + 1) * d_k]                            # (M, d_k)
        v_h = kv[:, D + h * d_k:D + (h + 1) * d_k]                    # (M, d_k)
        s = lax.dot_general(q_h, k_h, (((1,), (1,)), ((), ())),
                            preferred_element_type=jnp.float32)       # (N, M)
        s = s + bias
        s = s - jnp.max(s, axis=-1, keepdims=True)
        p = jnp.exp(s)
        p = p * pl.reciprocal(jnp.sum(p, axis=-1, keepdims=True), approx=True)
        ctx_heads.append(jnp.dot(p.astype(jnp.bfloat16), v_h,
                                 preferred_element_type=jnp.float32))  # (N, d_k)

    # Single full-D output projection over the concatenated heads.
    ctx = jnp.concatenate(ctx_heads, axis=-1).astype(jnp.bfloat16)     # (N, D)
    return jnp.dot(ctx, wo, preferred_element_type=jnp.float32) + bo


def decoder_block_kernel(xlens_ref,                                    # SMEM prefetch (B,)
                         ys_ref, xs_ref,
                         ln_g_ref, ln_b_ref,
                         self_wq_ref, self_bq_ref, self_wkv_ref, self_bkv_ref,
                         self_wo_ref, self_bo_ref,
                         src_wq_ref, src_bq_ref, src_wkv_ref, src_bkv_ref,
                         src_wo_ref, src_bo_ref,
                         w1_ref, b1_ref, w2_ref, b2_ref,
                         out_ref, *, L, T, n_heads, eps):
    b = pl.program_id(0)

    ys = ys_ref[0]            # (L, D) f32, this utterance
    xs = xs_ref[0]            # (T, D) f32
    ln_g = ln_g_ref[...]      # (3, D)
    ln_b = ln_b_ref[...]      # (3, D)

    # ---- masks (additive biases), built per utterance from tiny iotas ----
    qi = lax.broadcasted_iota(jnp.int32, (L, L), 0)
    ki = lax.broadcasted_iota(jnp.int32, (L, L), 1)
    yy_bias = jnp.where(qi >= ki, 0.0, NEG_BIAS).astype(jnp.float32)   # causal (L, L)

    kt = lax.broadcasted_iota(jnp.int32, (1, T), 1)
    xy_bias = jnp.where(kt < xlens_ref[b], 0.0, NEG_BIAS).astype(jnp.float32)  # (1, T)

    # ---- self-attention sublayer ----
    residual = ys
    ysn = _layernorm(ys, ln_g[0:1, :], ln_b[0:1, :], eps)
    out = _mha(ysn, ysn, yy_bias,
               self_wq_ref[...], self_bq_ref[...],
               self_wkv_ref[...], self_bkv_ref[...],
               self_wo_ref[...], self_bo_ref[...], n_heads) + residual

    # ---- source-target attention sublayer ----
    residual = out
    outn = _layernorm(out, ln_g[1:2, :], ln_b[1:2, :], eps)
    out = _mha(outn, xs, xy_bias,
               src_wq_ref[...], src_bq_ref[...],
               src_wkv_ref[...], src_bkv_ref[...],
               src_wo_ref[...], src_bo_ref[...], n_heads) + residual

    # ---- position-wise FFN sublayer (ReLU) ----
    residual = out
    outn = _layernorm(out, ln_g[2:3, :], ln_b[2:3, :], eps)
    h1 = jnp.dot(outn.astype(jnp.bfloat16), w1_ref[...],
                 preferred_element_type=jnp.float32) + b1_ref[...]
    h1 = jnp.maximum(h1, 0.0).astype(jnp.bfloat16)                     # bf16 intermediate
    ffn = jnp.dot(h1, w2_ref[...], preferred_element_type=jnp.float32) + b2_ref[...]

    out_ref[0] = (ffn + residual).astype(out_ref.dtype)


def transformer_decoder_block(ys, xs, xlens, params, *, n_heads, eps=1e-6):
    B, L, D = ys.shape
    T = xs.shape[1]
    F = params["w1"].shape[1]
    d_k = D // n_heads
    scale = float(d_k) ** -0.5

    # ---------- wrapper-side layout plumbing (free XLA ops, outside the kernel) ----------
    def split_attn(w, bias):
        # w: (4, D, D) = Wq, Wk, Wv, Wo (applied as x @ W[i]); bias: (4, D)
        wq = (w[0] * scale).astype(jnp.bfloat16)                       # scale folded in
        bq = bias[0:1, :] * scale
        wkv = jnp.concatenate([w[1], w[2]], axis=1).astype(jnp.bfloat16)   # (D, 2D)
        bkv = jnp.concatenate([bias[1:2, :], bias[2:3, :]], axis=1)        # (1, 2D)
        wo = w[3].astype(jnp.bfloat16)
        bo = bias[3:4, :]
        return wq, bq, wkv, bkv, wo, bo

    self_wq, self_bq, self_wkv, self_bkv, self_wo, self_bo = split_attn(
        params["self_w"], params["self_b"])
    src_wq, src_bq, src_wkv, src_bkv, src_wo, src_bo = split_attn(
        params["src_w"], params["src_b"])
    w1 = params["w1"].astype(jnp.bfloat16)
    w2 = params["w2"].astype(jnp.bfloat16)

    kernel = functools.partial(decoder_block_kernel, L=L, T=T, n_heads=n_heads, eps=eps)

    def _resident(shape):   # constant index_map -> fetched once, stays resident
        nd = len(shape)
        return pl.BlockSpec(shape, lambda b, xlens, _nd=nd: (0,) * _nd)

    grid_spec = pltpu.PrefetchScalarGridSpec(
        num_scalar_prefetch=1,
        grid=(B,),
        in_specs=[
            pl.BlockSpec((1, L, D), lambda b, xlens: (b, 0, 0)),       # ys[b]
            pl.BlockSpec((1, T, D), lambda b, xlens: (b, 0, 0)),       # xs[b]
            _resident((3, D)), _resident((3, D)),                      # LN gamma / beta
            _resident((D, D)), _resident((1, D)),                      # self Wq(+scale), bq
            _resident((D, 2 * D)), _resident((1, 2 * D)),              # self [Wk|Wv], bkv
            _resident((D, D)), _resident((1, D)),                      # self Wo, bo
            _resident((D, D)), _resident((1, D)),                      # src  Wq(+scale), bq
            _resident((D, 2 * D)), _resident((1, 2 * D)),              # src  [Wk|Wv], bkv
            _resident((D, D)), _resident((1, D)),                      # src  Wo, bo
            _resident((D, F)), _resident((1, F)),                      # FFN W1, b1
            _resident((F, D)), _resident((1, D)),                      # FFN W2, b2
        ],
        out_specs=pl.BlockSpec((1, L, D), lambda b, xlens: (b, 0, 0)),
    )

    return pl.pallas_call(
        kernel,
        out_shape=jax.ShapeDtypeStruct((B, L, D), jnp.float32),
        grid_spec=grid_spec,
        compiler_params=pltpu.CompilerParams(
            dimension_semantics=("parallel",),
            vmem_limit_bytes=48 * 1024 * 1024),
    )(xlens.astype(jnp.int32),
      ys, xs,
      params["ln_g"], params["ln_b"],
      self_wq, self_bq, self_wkv, self_bkv, self_wo, self_bo,
      src_wq, src_bq, src_wkv, src_bkv, src_wo, src_bo,
      w1, params["b1"], w2, params["b2"])


# ----------------------------- pure-JAX reference -----------------------------
def _ref_layernorm(x, g, b, eps):
    mu = jnp.mean(x, axis=-1, keepdims=True)
    var = jnp.mean((x - mu) ** 2, axis=-1, keepdims=True)
    return (x - mu) / jnp.sqrt(var + eps) * g + b


def _ref_mha(q_in, k_in, v_in, mask, W, b, n_heads):
    B, Lq, D = q_in.shape
    Lk = k_in.shape[1]
    d_k = D // n_heads
    q = (q_in @ W[0] + b[0]).reshape(B, Lq, n_heads, d_k).transpose(0, 2, 1, 3)
    k = (k_in @ W[1] + b[1]).reshape(B, Lk, n_heads, d_k).transpose(0, 2, 1, 3)
    v = (v_in @ W[2] + b[2]).reshape(B, Lk, n_heads, d_k).transpose(0, 2, 1, 3)
    e = jnp.einsum("bhqd,bhkd->bhqk", q, k) * (d_k ** -0.5)
    e = jnp.where(mask[:, None, :, :] > 0, e, NEG_INF)
    p = jax.nn.softmax(e, axis=-1)
    ctx = jnp.einsum("bhqk,bhkd->bhqd", p, v)
    ctx = ctx.transpose(0, 2, 1, 3).reshape(B, Lq, D)
    return ctx @ W[3] + b[3]


def reference_block(ys, yy_mask, xs, xy_mask, p, n_heads, eps=1e-6):
    res = ys
    ysn = _ref_layernorm(ys, p["ln_g"][0], p["ln_b"][0], eps)
    out = _ref_mha(ysn, ysn, ysn, yy_mask, p["self_w"], p["self_b"], n_heads) + res
    res = out
    outn = _ref_layernorm(out, p["ln_g"][1], p["ln_b"][1], eps)
    out = _ref_mha(outn, xs, xs, xy_mask, p["src_w"], p["src_b"], n_heads) + res
    res = out
    outn = _ref_layernorm(out, p["ln_g"][2], p["ln_b"][2], eps)
    h = jnp.maximum(outn @ p["w1"] + p["b1"][0], 0.0)
    return h @ p["w2"] + p["b2"][0] + res


# ------------------------------------ main ------------------------------------
if __name__ == "__main__":
    B, L, T, D, F, H = 2, 8, 16, 32, 64, 4

    key = jax.random.PRNGKey(0)
    ks = jax.random.split(key, 12)

    ys = jax.random.normal(ks[0], (B, L, D), jnp.float32)
    xs = jax.random.normal(ks[1], (B, T, D), jnp.float32)

    # per-utterance valid encoder lengths (batch 0 sees all T, batch 1 sees 12 frames)
    xlens = jnp.array([T, 12], dtype=jnp.int32)

    # masks only used by the pure-JAX reference; the kernel rebuilds them in-kernel
    yy_mask = jnp.tril(jnp.ones((L, L), jnp.float32))[None].repeat(B, axis=0)
    xy_mask = (jnp.arange(T)[None, None, :] < xlens[:, None, None]).astype(jnp.float32)
    xy_mask = jnp.broadcast_to(xy_mask, (B, L, T))

    s = 0.08
    params = {
        "ln_g": jnp.ones((3, D), jnp.float32),
        "ln_b": jnp.zeros((3, D), jnp.float32),
        "self_w": jax.random.normal(ks[2], (4, D, D), jnp.float32) * s,
        "self_b": jax.random.normal(ks[3], (4, D), jnp.float32) * s,
        "src_w": jax.random.normal(ks[4], (4, D, D), jnp.float32) * s,
        "src_b": jax.random.normal(ks[5], (4, D), jnp.float32) * s,
        "w1": jax.random.normal(ks[6], (D, F), jnp.float32) * s,
        "b1": jax.random.normal(ks[7], (1, F), jnp.float32) * s,
        "w2": jax.random.normal(ks[8], (F, D), jnp.float32) * s,
        "b2": jax.random.normal(ks[9], (1, D), jnp.float32) * s,
    }

    out = transformer_decoder_block(ys, xs, xlens, params, n_heads=H)
    out = jax.block_until_ready(out)

    ref = reference_block(ys, yy_mask, xs, xy_mask, params, n_heads=H)
    assert out.shape == (B, L, D)
    # tolerance accounts for bf16 MXU operands + approx EUP reciprocal (f32 accumulate)
    assert jnp.allclose(out, ref, atol=3e-2, rtol=3e-2), "mismatch vs reference"

    print("KERNEL_OK")
</pallas_src>

<mosaic_0001>
module attributes {stable_mosaic.version = 11 : i64} {
  func.func @decoder_block_kernel(%arg0: i32, %arg1: memref<2xi32, #tpu.memory_space<smem>>, %arg2: memref<1x8x32xf32, #tpu.memory_space<vmem>>, %arg3: memref<1x16x32xf32, #tpu.memory_space<vmem>>, %arg4: memref<3x32xf32, #tpu.memory_space<vmem>>, %arg5: memref<3x32xf32, #tpu.memory_space<vmem>>, %arg6: memref<32x32xbf16, #tpu.memory_space<vmem>>, %arg7: memref<1x32xf32, #tpu.memory_space<vmem>>, %arg8: memref<32x64xbf16, #tpu.memory_space<vmem>>, %arg9: memref<1x64xf32, #tpu.memory_space<vmem>>, %arg10: memref<32x32xbf16, #tpu.memory_space<vmem>>, %arg11: memref<1x32xf32, #tpu.memory_space<vmem>>, %arg12: memref<32x32xbf16, #tpu.memory_space<vmem>>, %arg13: memref<1x32xf32, #tpu.memory_space<vmem>>, %arg14: memref<32x64xbf16, #tpu.memory_space<vmem>>, %arg15: memref<1x64xf32, #tpu.memory_space<vmem>>, %arg16: memref<32x32xbf16, #tpu.memory_space<vmem>>, %arg17: memref<1x32xf32, #tpu.memory_space<vmem>>, %arg18: memref<32x64xbf16, #tpu.memory_space<vmem>>, %arg19: memref<1x64xf32, #tpu.memory_space<vmem>>, %arg20: memref<64x32xbf16, #tpu.memory_space<vmem>>, %arg21: memref<1x32xf32, #tpu.memory_space<vmem>>, %arg22: memref<1x8x32xf32, #tpu.memory_space<vmem>>) attributes {dimension_semantics = [#tpu.dimension_semantics<parallel>], iteration_bounds = array<i64: 2>, scalar_prefetch = 1 : i64, scratch_operands = 0 : i64, tpu.core_type = #tpu.core_type<tc>, window_params = [{transform_indices = @transform_0, window_bounds = array<i64: 1, 8, 32>}, {transform_indices = @transform_1, window_bounds = array<i64: 1, 16, 32>}, {pipeline_mode = #tpu.pipeline_mode<synchronous>, transform_indices = @transform_2, window_bounds = array<i64: 3, 32>}, {pipeline_mode = #tpu.pipeline_mode<synchronous>, transform_indices = @transform_3, window_bounds = array<i64: 3, 32>}, {pipeline_mode = #tpu.pipeline_mode<synchronous>, transform_indices = @transform_4, window_bounds = array<i64: 32, 32>}, {pipeline_mode = #tpu.pipeline_mode<synchronous>, transform_indices = @transform_5, window_bounds = array<i64: 1, 32>}, {pipeline_mode = #tpu.pipeline_mode<synchronous>, transform_indices = @transform_6, window_bounds = array<i64: 32, 64>}, {pipeline_mode = #tpu.pipeline_mode<synchronous>, transform_indices = @transform_7, window_bounds = array<i64: 1, 64>}, {pipeline_mode = #tpu.pipeline_mode<synchronous>, transform_indices = @transform_8, window_bounds = array<i64: 32, 32>}, {pipeline_mode = #tpu.pipeline_mode<synchronous>, transform_indices = @transform_9, window_bounds = array<i64: 1, 32>}, {pipeline_mode = #tpu.pipeline_mode<synchronous>, transform_indices = @transform_10, window_bounds = array<i64: 32, 32>}, {pipeline_mode = #tpu.pipeline_mode<synchronous>, transform_indices = @transform_11, window_bounds = array<i64: 1, 32>}, {pipeline_mode = #tpu.pipeline_mode<synchronous>, transform_indices = @transform_12, window_bounds = array<i64: 32, 64>}, {pipeline_mode = #tpu.pipeline_mode<synchronous>, transform_indices = @transform_13, window_bounds = array<i64: 1, 64>}, {pipeline_mode = #tpu.pipeline_mode<synchronous>, transform_indices = @transform_14, window_bounds = array<i64: 32, 32>}, {pipeline_mode = #tpu.pipeline_mode<synchronous>, transform_indices = @transform_15, window_bounds = array<i64: 1, 32>}, {pipeline_mode = #tpu.pipeline_mode<synchronous>, transform_indices = @transform_16, window_bounds = array<i64: 32, 64>}, {pipeline_mode = #tpu.pipeline_mode<synchronous>, transform_indices = @transform_17, window_bounds = array<i64: 1, 64>}, {pipeline_mode = #tpu.pipeline_mode<synchronous>, transform_indices = @transform_18, window_bounds = array<i64: 64, 32>}, {pipeline_mode = #tpu.pipeline_mode<synchronous>, transform_indices = @transform_19, window_bounds = array<i64: 1, 32>}, {transform_indices = @transform_20, window_bounds = array<i64: 1, 8, 32>}]} {
    %c0 = arith.constant 0 : index
    %c0_0 = arith.constant 0 : index
    %c0_1 = arith.constant 0 : index
    %0 = vector.load %arg2[%c0, %c0_0, %c0_1] : memref<1x8x32xf32, #tpu.memory_space<vmem>>, vector<1x8x32xf32>
    %1 = vector.shape_cast %0 : vector<1x8x32xf32> to vector<8x32xf32>
    %c0_2 = arith.constant 0 : index
    %c0_3 = arith.constant 0 : index
    %c0_4 = arith.constant 0 : index
    %2 = vector.load %arg3[%c0_2, %c0_3, %c0_4] : memref<1x16x32xf32, #tpu.memory_space<vmem>>, vector<1x16x32xf32>
    %3 = vector.shape_cast %2 : vector<1x16x32xf32> to vector<16x32xf32>
    %c0_5 = arith.constant 0 : index
    %c0_6 = arith.constant 0 : index
    %4 = vector.load %arg4[%c0_5, %c0_6] : memref<3x32xf32, #tpu.memory_space<vmem>>, vector<3x32xf32>
    %c0_7 = arith.constant 0 : index
    %c0_8 = arith.constant 0 : index
    %5 = vector.load %arg5[%c0_7, %c0_8] : memref<3x32xf32, #tpu.memory_space<vmem>>, vector<3x32xf32>
    %6 = tpu.iota {dimensions = array<i32: 0>} : vector<8x8xi32>
    %7 = tpu.iota {dimensions = array<i32: 1>} : vector<8x8xi32>
    %8 = arith.cmpi sge, %6, %7 : vector<8x8xi32>
    %cst = arith.constant 0.000000e+00 : f32
    %cst_9 = arith.constant -1.000000e+09 : f32
    %9 = vector.broadcast %cst : f32 to vector<8x8xf32>
    %10 = vector.broadcast %cst_9 : f32 to vector<8x8xf32>
    %11 = arith.select %8, %9, %10 : vector<8x8xi1>, vector<8x8xf32>
    %12 = tpu.iota {dimensions = array<i32: 1>} : vector<1x16xi32>
    %13 = arith.index_cast %arg0 : i32 to index
    %14 = memref.load %arg1[%13] : memref<2xi32, #tpu.memory_space<smem>>
    %15 = vector.broadcast %14 : i32 to vector<1x16xi32>
    %16 = arith.cmpi slt, %12, %15 : vector<1x16xi32>
    %cst_10 = arith.constant 0.000000e+00 : f32
    %cst_11 = arith.constant -1.000000e+09 : f32
    %17 = vector.broadcast %cst_10 : f32 to vector<1x16xf32>
    %18 = vector.broadcast %cst_11 : f32 to vector<1x16xf32>
    %19 = arith.select %16, %17, %18 : vector<1x16xi1>, vector<1x16xf32>
    %20 = vector.extract_strided_slice %4 {offsets = [0, 0], sizes = [1, 32], strides = [1, 1]} : vector<3x32xf32> to vector<1x32xf32>
    %21 = vector.extract_strided_slice %5 {offsets = [0, 0], sizes = [1, 32], strides = [1, 1]} : vector<3x32xf32> to vector<1x32xf32>
    %cst_12 = arith.constant dense<0.000000e+00> : vector<8xf32>
    %22 = vector.multi_reduction <add>, %1, %cst_12 [1] : vector<8x32xf32> to vector<8xf32>
    %23 = vector.shape_cast %22 : vector<8xf32> to vector<8x1xf32>
    %cst_13 = arith.constant 3.200000e+01 : f32
    %24 = vector.broadcast %cst_13 : f32 to vector<8x1xf32>
    %25 = arith.divf %23, %24 : vector<8x1xf32>
    %26 = vector.broadcast %25 : vector<8x1xf32> to vector<8x32xf32>
    %27 = arith.subf %1, %26 : vector<8x32xf32>
    %28 = arith.mulf %27, %27 : vector<8x32xf32>
    %cst_14 = arith.constant dense<0.000000e+00> : vector<8xf32>
    %29 = vector.multi_reduction <add>, %28, %cst_14 [1] : vector<8x32xf32> to vector<8xf32>
    %30 = vector.shape_cast %29 : vector<8xf32> to vector<8x1xf32>
    %cst_15 = arith.constant 3.200000e+01 : f32
    %31 = vector.broadcast %cst_15 : f32 to vector<8x1xf32>
    %32 = arith.divf %30, %31 : vector<8x1xf32>
    %33 = vector.broadcast %25 : vector<8x1xf32> to vector<8x32xf32>
    %34 = arith.subf %1, %33 : vector<8x32xf32>
    %cst_16 = arith.constant 9.99999997E-7 : f32
    %35 = vector.broadcast %cst_16 : f32 to vector<8x1xf32>
    %36 = arith.addf %32, %35 : vector<8x1xf32>
    %37 = math.rsqrt %36 : vector<8x1xf32>
    %38 = vector.broadcast %37 : vector<8x1xf32> to vector<8x32xf32>
    %39 = arith.mulf %34, %38 : vector<8x32xf32>
    %40 = vector.broadcast %20 : vector<1x32xf32> to vector<8x32xf32>
    %41 = arith.mulf %39, %40 : vector<8x32xf32>
    %42 = vector.broadcast %21 : vector<1x32xf32> to vector<8x32xf32>
    %43 = arith.addf %41, %42 : vector<8x32xf32>
    %c0_17 = arith.constant 0 : index
    %c0_18 = arith.constant 0 : index
    %44 = vector.load %arg6[%c0_17, %c0_18] : memref<32x32xbf16, #tpu.memory_space<vmem>>, vector<32x32xbf16>
    %c0_19 = arith.constant 0 : index
    %c0_20 = arith.constant 0 : index
    %45 = vector.load %arg7[%c0_19, %c0_20] : memref<1x32xf32, #tpu.memory_space<vmem>>, vector<1x32xf32>
    %c0_21 = arith.constant 0 : index
    %c0_22 = arith.constant 0 : index
    %46 = vector.load %arg8[%c0_21, %c0_22] : memref<32x64xbf16, #tpu.memory_space<vmem>>, vector<32x64xbf16>
    %c0_23 = arith.constant 0 : index
    %c0_24 = arith.constant 0 : index
    %47 = vector.load %arg9[%c0_23, %c0_24] : memref<1x64xf32, #tpu.memory_space<vmem>>, vector<1x64xf32>
    %c0_25 = arith.constant 0 : index
    %c0_26 = arith.constant 0 : index
    %48 = vector.load %arg10[%c0_25, %c0_26] : memref<32x32xbf16, #tpu.memory_space<vmem>>, vector<32x32xbf16>
    %c0_27 = arith.constant 0 : index
    %c0_28 = arith.constant 0 : index
    %49 = vector.load %arg11[%c0_27, %c0_28] : memref<1x32xf32, #tpu.memory_space<vmem>>, vector<1x32xf32>
    %50 = arith.truncf %43 : vector<8x32xf32> to vector<8x32xbf16>
    %cst_29 = arith.constant dense<0.000000e+00> : vector<8x32xf32>
    %51 = tpu.matmul %50, %44, %cst_29 {dimension_numbers = #tpu.dot_dimension_numbers<[1], [0], [0], [1], [0, 0, 1, 1], [], []>} : vector<8x32xbf16>, vector<32x32xbf16>, vector<8x32xf32> -> vector<8x32xf32>
    %52 = vector.broadcast %45 : vector<1x32xf32> to vector<8x32xf32>
    %53 = arith.addf %51, %52 : vector<8x32xf32>
    %54 = arith.truncf %43 : vector<8x32xf32> to vector<8x32xbf16>
    %cst_30 = arith.constant dense<0.000000e+00> : vector<8x64xf32>
    %55 = tpu.matmul %54, %46, %cst_30 {dimension_numbers = #tpu.dot_dimension_numbers<[1], [0], [0], [1], [0, 0, 1, 1], [], []>} : vector<8x32xbf16>, vector<32x64xbf16>, vector<8x64xf32> -> vector<8x64xf32>
    %56 = vector.broadcast %47 : vector<1x64xf32> to vector<8x64xf32>
    %57 = arith.addf %55, %56 : vector<8x64xf32>
    %58 = arith.truncf %53 : vector<8x32xf32> to vector<8x32xbf16>
    %59 = arith.truncf %57 : vector<8x64xf32> to vector<8x64xbf16>
    %60 = vector.extract_strided_slice %58 {offsets = [0, 0], sizes = [8, 8], strides = [1, 1]} : vector<8x32xbf16> to vector<8x8xbf16>
    %61 = vector.extract_strided_slice %59 {offsets = [0, 0], sizes = [8, 8], strides = [1, 1]} : vector<8x64xbf16> to vector<8x8xbf16>
    %62 = vector.extract_strided_slice %59 {offsets = [0, 32], sizes = [8, 8], strides = [1, 1]} : vector<8x64xbf16> to vector<8x8xbf16>
    %cst_31 = arith.constant dense<0.000000e+00> : vector<8x8xf32>
    %63 = tpu.matmul %60, %61, %cst_31 {dimension_numbers = #tpu.dot_dimension_numbers<[1], [1], [0], [0], [0, 0, 1, 0], [], []>} : vector<8x8xbf16>, vector<8x8xbf16>, vector<8x8xf32> -> vector<8x8xf32>
    %64 = arith.addf %63, %11 : vector<8x8xf32>
    %cst_32 = arith.constant dense<0xFF800000> : vector<8xf32>
    %65 = vector.multi_reduction <maximumf>, %64, %cst_32 [1] : vector<8x8xf32> to vector<8xf32>
    %66 = vector.shape_cast %65 : vector<8xf32> to vector<8x1xf32>
    %67 = vector.broadcast %66 : vector<8x1xf32> to vector<8x8xf32>
    %68 = arith.subf %64, %67 : vector<8x8xf32>
    %69 = math.exp %68 : vector<8x8xf32>
    %cst_33 = arith.constant dense<0.000000e+00> : vector<8xf32>
    %70 = vector.multi_reduction <add>, %69, %cst_33 [1] : vector<8x8xf32> to vector<8xf32>
    %71 = vector.shape_cast %70 : vector<8xf32> to vector<8x1xf32>
    %72 = tpu.reciprocal %71 {approx = true} : vector<8x1xf32> -> vector<8x1xf32>
    %73 = vector.broadcast %72 : vector<8x1xf32> to vector<8x8xf32>
    %74 = arith.mulf %69, %73 : vector<8x8xf32>
    %75 = arith.truncf %74 : vector<8x8xf32> to vector<8x8xbf16>
    %cst_34 = arith.constant dense<0.000000e+00> : vector<8x8xf32>
    %76 = tpu.matmul %75, %62, %cst_34 {dimension_numbers = #tpu.dot_dimension_numbers<[1], [0], [0], [1], [0, 0, 1, 1], [], []>} : vector<8x8xbf16>, vector<8x8xbf16>, vector<8x8xf32> -> vector<8x8xf32>
    %77 = vector.extract_strided_slice %58 {offsets = [0, 8], sizes = [8, 8], strides = [1, 1]} : vector<8x32xbf16> to vector<8x8xbf16>
    %78 = vector.extract_strided_slice %59 {offsets = [0, 8], sizes = [8, 8], strides = [1, 1]} : vector<8x64xbf16> to vector<8x8xbf16>
    %79 = vector.extract_strided_slice %59 {offsets = [0, 40], sizes = [8, 8], strides = [1, 1]} : vector<8x64xbf16> to vector<8x8xbf16>
    %cst_35 = arith.constant dense<0.000000e+00> : vector<8x8xf32>
    %80 = tpu.matmul %77, %78, %cst_35 {dimension_numbers = #tpu.dot_dimension_numbers<[1], [1], [0], [0], [0, 0, 1, 0], [], []>} : vector<8x8xbf16>, vector<8x8xbf16>, vector<8x8xf32> -> vector<8x8xf32>
    %81 = arith.addf %80, %11 : vector<8x8xf32>
    %cst_36 = arith.constant dense<0xFF800000> : vector<8xf32>
    %82 = vector.multi_reduction <maximumf>, %81, %cst_36 [1] : vector<8x8xf32> to vector<8xf32>
    %83 = vector.shape_cast %82 : vector<8xf32> to vector<8x1xf32>
    %84 = vector.broadcast %83 : vector<8x1xf32> to vector<8x8xf32>
    %85 = arith.subf %81, %84 : vector<8x8xf32>
    %86 = math.exp %85 : vector<8x8xf32>
    %cst_37 = arith.constant dense<0.000000e+00> : vector<8xf32>
    %87 = vector.multi_reduction <add>, %86, %cst_37 [1] : vector<8x8xf32> to vector<8xf32>
    %88 = vector.shape_cast %87 : vector<8xf32> to vector<8x1xf32>
    %89 = tpu.reciprocal %88 {approx = true} : vector<8x1xf32> -> vector<8x1xf32>
    %90 = vector.broadcast %89 : vector<8x1xf32> to vector<8x8xf32>
    %91 = arith.mulf %86, %90 : vector<8x8xf32>
    %92 = arith.truncf %91 : vector<8x8xf32> to vector<8x8xbf16>
    %cst_38 = arith.constant dense<0.000000e+00> : vector<8x8xf32>
    %93 = tpu.matmul %92, %79, %cst_38 {dimension_numbers = #tpu.dot_dimension_numbers<[1], [0], [0], [1], [0, 0, 1, 1], [], []>} : vector<8x8xbf16>, vector<8x8xbf16>, vector<8x8xf32> -> vector<8x8xf32>
    %94 = vector.extract_strided_slice %58 {offsets = [0, 16], sizes = [8, 8], strides = [1, 1]} : vector<8x32xbf16> to vector<8x8xbf16>
    %95 = vector.extract_strided_slice %59 {offsets = [0, 16], sizes = [8, 8], strides = [1, 1]} : vector<8x64xbf16> to vector<8x8xbf16>
    %96 = vector.extract_strided_slice %59 {offsets = [0, 48], sizes = [8, 8], strides = [1, 1]} : vector<8x64xbf16> to vector<8x8xbf16>
    %cst_39 = arith.constant dense<0.000000e+00> : vector<8x8xf32>
    %97 = tpu.matmul %94, %95, %cst_39 {dimension_numbers = #tpu.dot_dimension_numbers<[1], [1], [0], [0], [0, 0, 1, 0], [], []>} : vector<8x8xbf16>, vector<8x8xbf16>, vector<8x8xf32> -> vector<8x8xf32>
    %98 = arith.addf %97, %11 : vector<8x8xf32>
    %cst_40 = arith.constant dense<0xFF800000> : vector<8xf32>
    %99 = vector.multi_reduction <maximumf>, %98, %cst_40 [1] : vector<8x8xf32> to vector<8xf32>
    %100 = vector.shape_cast %99 : vector<8xf32> to vector<8x1xf32>
    %101 = vector.broadcast %100 : vector<8x1xf32> to vector<8x8xf32>
    %102 = arith.subf %98, %101 : vector<8x8xf32>
    %103 = math.exp %102 : vector<8x8xf32>
    %cst_41 = arith.constant dense<0.000000e+00> : vector<8xf32>
    %104 = vector.multi_reduction <add>, %103, %cst_41 [1] : vector<8x8xf32> to vector<8xf32>
    %105 = vector.shape_cast %104 : vector<8xf32> to vector<8x1xf32>
    %106 = tpu.reciprocal %105 {approx = true} : vector<8x1xf32> -> vector<8x1xf32>
    %107 = vector.broadcast %106 : vector<8x1xf32> to vector<8x8xf32>
    %108 = arith.mulf %103, %107 : vector<8x8xf32>
    %109 = arith.truncf %108 : vector<8x8xf32> to vector<8x8xbf16>
    %cst_42 = arith.constant dense<0.000000e+00> : vector<8x8xf32>
    %110 = tpu.matmul %109, %96, %cst_42 {dimension_numbers = #tpu.dot_dimension_numbers<[1], [0], [0], [1], [0, 0, 1, 1], [], []>} : vector<8x8xbf16>, vector<8x8xbf16>, vector<8x8xf32> -> vector<8x8xf32>
    %111 = vector.extract_strided_slice %58 {offsets = [0, 24], sizes = [8, 8], strides = [1, 1]} : vector<8x32xbf16> to vector<8x8xbf16>
    %112 = vector.extract_strided_slice %59 {offsets = [0, 24], sizes = [8, 8], strides = [1, 1]} : vector<8x64xbf16> to vector<8x8xbf16>
    %113 = vector.extract_strided_slice %59 {offsets = [0, 56], sizes = [8, 8], strides = [1, 1]} : vector<8x64xbf16> to vector<8x8xbf16>
    %cst_43 = arith.constant dense<0.000000e+00> : vector<8x8xf32>
    %114 = tpu.matmul %111, %112, %cst_43 {dimension_numbers = #tpu.dot_dimension_numbers<[1], [1], [0], [0], [0, 0, 1, 0], [], []>} : vector<8x8xbf16>, vector<8x8xbf16>, vector<8x8xf32> -> vector<8x8xf32>
    %115 = arith.addf %114, %11 : vector<8x8xf32>
    %cst_44 = arith.constant dense<0xFF800000> : vector<8xf32>
    %116 = vector.multi_reduction <maximumf>, %115, %cst_44 [1] : vector<8x8xf32> to vector<8xf32>
    %117 = vector.shape_cast %116 : vector<8xf32> to vector<8x1xf32>
    %118 = vector.broadcast %117 : vector<8x1xf32> to vector<8x8xf32>
    %119 = arith.subf %115, %118 : vector<8x8xf32>
    %120 = math.exp %119 : vector<8x8xf32>
    %cst_45 = arith.constant dense<0.000000e+00> : vector<8xf32>
    %121 = vector.multi_reduction <add>, %120, %cst_45 [1] : vector<8x8xf32> to vector<8xf32>
    %122 = vector.shape_cast %121 : vector<8xf32> to vector<8x1xf32>
    %123 = tpu.reciprocal %122 {approx = true} : vector<8x1xf32> -> vector<8x1xf32>
    %124 = vector.broadcast %123 : vector<8x1xf32> to vector<8x8xf32>
    %125 = arith.mulf %120, %124 : vector<8x8xf32>
    %126 = arith.truncf %125 : vector<8x8xf32> to vector<8x8xbf16>
    %cst_46 = arith.constant dense<0.000000e+00> : vector<8x8xf32>
    %127 = tpu.matmul %126, %113, %cst_46 {dimension_numbers = #tpu.dot_dimension_numbers<[1], [0], [0], [1], [0, 0, 1, 1], [], []>} : vector<8x8xbf16>, vector<8x8xbf16>, vector<8x8xf32> -> vector<8x8xf32>
    %128 = tpu.concatenate %76, %93, %110, %127 in 1 : vector<8x8xf32>, vector<8x8xf32>, vector<8x8xf32>, vector<8x8xf32> -> vector<8x32xf32>
    %129 = arith.truncf %128 : vector<8x32xf32> to vector<8x32xbf16>
    %cst_47 = arith.constant dense<0.000000e+00> : vector<8x32xf32>
    %130 = tpu.matmul %129, %48, %cst_47 {dimension_numbers = #tpu.dot_dimension_numbers<[1], [0], [0], [1], [0, 0, 1, 1], [], []>} : vector<8x32xbf16>, vector<32x32xbf16>, vector<8x32xf32> -> vector<8x32xf32>
    %131 = vector.broadcast %49 : vector<1x32xf32> to vector<8x32xf32>
    %132 = arith.addf %130, %131 : vector<8x32xf32>
    %133 = arith.addf %132, %1 : vector<8x32xf32>
    %134 = vector.extract_strided_slice %4 {offsets = [1, 0], sizes = [1, 32], strides = [1, 1]} : vector<3x32xf32> to vector<1x32xf32>
    %135 = vector.extract_strided_slice %5 {offsets = [1, 0], sizes = [1, 32], strides = [1, 1]} : vector<3x32xf32> to vector<1x32xf32>
    %cst_48 = arith.constant dense<0.000000e+00> : vector<8xf32>
    %136 = vector.multi_reduction <add>, %133, %cst_48 [1] : vector<8x32xf32> to vector<8xf32>
    %137 = vector.shape_cast %136 : vector<8xf32> to vector<8x1xf32>
    %cst_49 = arith.constant 3.200000e+01 : f32
    %138 = vector.broadcast %cst_49 : f32 to vector<8x1xf32>
    %139 = arith.divf %137, %138 : vector<8x1xf32>
    %140 = vector.broadcast %139 : vector<8x1xf32> to vector<8x32xf32>
    %141 = arith.subf %133, %140 : vector<8x32xf32>
    %142 = arith.mulf %141, %141 : vector<8x32xf32>
    %cst_50 = arith.constant dense<0.000000e+00> : vector<8xf32>
    %143 = vector.multi_reduction <add>, %142, %cst_50 [1] : vector<8x32xf32> to vector<8xf32>
    %144 = vector.shape_cast %143 : vector<8xf32> to vector<8x1xf32>
    %cst_51 = arith.constant 3.200000e+01 : f32
    %145 = vector.broadcast %cst_51 : f32 to vector<8x1xf32>
    %146 = arith.divf %144, %145 : vector<8x1xf32>
    %147 = vector.broadcast %139 : vector<8x1xf32> to vector<8x32xf32>
    %148 = arith.subf %133, %147 : vector<8x32xf32>
    %cst_52 = arith.constant 9.99999997E-7 : f32
    %149 = vector.broadcast %cst_52 : f32 to vector<8x1xf32>
    %150 = arith.addf %146, %149 : vector<8x1xf32>
    %151 = math.rsqrt %150 : vector<8x1xf32>
    %152 = vector.broadcast %151 : vector<8x1xf32> to vector<8x32xf32>
    %153 = arith.mulf %148, %152 : vector<8x32xf32>
    %154 = vector.broadcast %134 : vector<1x32xf32> to vector<8x32xf32>
    %155 = arith.mulf %153, %154 : vector<8x32xf32>
    %156 = vector.broadcast %135 : vector<1x32xf32> to vector<8x32xf32>
    %157 = arith.addf %155, %156 : vector<8x32xf32>
    %c0_53 = arith.constant 0 : index
    %c0_54 = arith.constant 0 : index
    %158 = vector.load %arg12[%c0_53, %c0_54] : memref<32x32xbf16, #tpu.memory_space<vmem>>, vector<32x32xbf16>
    %c0_55 = arith.constant 0 : index
    %c0_56 = arith.constant 0 : index
    %159 = vector.load %arg13[%c0_55, %c0_56] : memref<1x32xf32, #tpu.memory_space<vmem>>, vector<1x32xf32>
    %c0_57 = arith.constant 0 : index
    %c0_58 = arith.constant 0 : index
    %160 = vector.load %arg14[%c0_57, %c0_58] : memref<32x64xbf16, #tpu.memory_space<vmem>>, vector<32x64xbf16>
    %c0_59 = arith.constant 0 : index
    %c0_60 = arith.constant 0 : index
    %161 = vector.load %arg15[%c0_59, %c0_60] : memref<1x64xf32, #tpu.memory_space<vmem>>, vector<1x64xf32>
    %c0_61 = arith.constant 0 : index
    %c0_62 = arith.constant 0 : index
    %162 = vector.load %arg16[%c0_61, %c0_62] : memref<32x32xbf16, #tpu.memory_space<vmem>>, vector<32x32xbf16>
    %c0_63 = arith.constant 0 : index
    %c0_64 = arith.constant 0 : index
    %163 = vector.load %arg17[%c0_63, %c0_64] : memref<1x32xf32, #tpu.memory_space<vmem>>, vector<1x32xf32>
    %164 = arith.truncf %157 : vector<8x32xf32> to vector<8x32xbf16>
    %cst_65 = arith.constant dense<0.000000e+00> : vector<8x32xf32>
    %165 = tpu.matmul %164, %158, %cst_65 {dimension_numbers = #tpu.dot_dimension_numbers<[1], [0], [0], [1], [0, 0, 1, 1], [], []>} : vector<8x32xbf16>, vector<32x32xbf16>, vector<8x32xf32> -> vector<8x32xf32>
    %166 = vector.broadcast %159 : vector<1x32xf32> to vector<8x32xf32>
    %167 = arith.addf %165, %166 : vector<8x32xf32>
    %168 = arith.truncf %3 : vector<16x32xf32> to vector<16x32xbf16>
    %cst_66 = arith.constant dense<0.000000e+00> : vector<16x64xf32>
    %169 = tpu.matmul %168, %160, %cst_66 {dimension_numbers = #tpu.dot_dimension_numbers<[1], [0], [0], [1], [0, 0, 1, 1], [], []>} : vector<16x32xbf16>, vector<32x64xbf16>, vector<16x64xf32> -> vector<16x64xf32>
    %170 = vector.broadcast %161 : vector<1x64xf32> to vector<16x64xf32>
    %171 = arith.addf %169, %170 : vector<16x64xf32>
    %172 = arith.truncf %167 : vector<8x32xf32> to vector<8x32xbf16>
    %173 = arith.truncf %171 : vector<16x64xf32> to vector<16x64xbf16>
    %174 = vector.extract_strided_slice %172 {offsets = [0, 0], sizes = [8, 8], strides = [1, 1]} : vector<8x32xbf16> to vector<8x8xbf16>
    %175 = vector.extract_strided_slice %173 {offsets = [0, 0], sizes = [16, 8], strides = [1, 1]} : vector<16x64xbf16> to vector<16x8xbf16>
    %176 = vector.extract_strided_slice %173 {offsets = [0, 32], sizes = [16, 8], strides = [1, 1]} : vector<16x64xbf16> to vector<16x8xbf16>
    %cst_67 = arith.constant dense<0.000000e+00> : vector<8x16xf32>
    %177 = tpu.matmul %174, %175, %cst_67 {dimension_numbers = #tpu.dot_dimension_numbers<[1], [1], [0], [0], [0, 0, 1, 0], [], []>} : vector<8x8xbf16>, vector<16x8xbf16>, vector<8x16xf32> -> vector<8x16xf32>
    %178 = vector.broadcast %19 : vector<1x16xf32> to vector<8x16xf32>
    %179 = arith.addf %177, %178 : vector<8x16xf32>
    %cst_68 = arith.constant dense<0xFF800000> : vector<8xf32>
    %180 = vector.multi_reduction <maximumf>, %179, %cst_68 [1] : vector<8x16xf32> to vector<8xf32>
    %181 = vector.shape_cast %180 : vector<8xf32> to vector<8x1xf32>
    %182 = vector.broadcast %181 : vector<8x1xf32> to vector<8x16xf32>
    %183 = arith.subf %179, %182 : vector<8x16xf32>
    %184 = math.exp %183 : vector<8x16xf32>
    %cst_69 = arith.constant dense<0.000000e+00> : vector<8xf32>
    %185 = vector.multi_reduction <add>, %184, %cst_69 [1] : vector<8x16xf32> to vector<8xf32>
    %186 = vector.shape_cast %185 : vector<8xf32> to vector<8x1xf32>
    %187 = tpu.reciprocal %186 {approx = true} : vector<8x1xf32> -> vector<8x1xf32>
    %188 = vector.broadcast %187 : vector<8x1xf32> to vector<8x16xf32>
    %189 = arith.mulf %184, %188 : vector<8x16xf32>
    %190 = arith.truncf %189 : vector<8x16xf32> to vector<8x16xbf16>
    %cst_70 = arith.constant dense<0.000000e+00> : vector<8x8xf32>
    %191 = tpu.matmul %190, %176, %cst_70 {dimension_numbers = #tpu.dot_dimension_numbers<[1], [0], [0], [1], [0, 0, 1, 1], [], []>} : vector<8x16xbf16>, vector<16x8xbf16>, vector<8x8xf32> -> vector<8x8xf32>
    %192 = vector.extract_strided_slice %172 {offsets = [0, 8], sizes = [8, 8], strides = [1, 1]} : vector<8x32xbf16> to vector<8x8xbf16>
    %193 = vector.extract_strided_slice %173 {offsets = [0, 8], sizes = [16, 8], strides = [1, 1]} : vector<16x64xbf16> to vector<16x8xbf16>
    %194 = vector.extract_strided_slice %173 {offsets = [0, 40], sizes = [16, 8], strides = [1, 1]} : vector<16x64xbf16> to vector<16x8xbf16>
    %cst_71 = arith.constant dense<0.000000e+00> : vector<8x16xf32>
    %195 = tpu.matmul %192, %193, %cst_71 {dimension_numbers = #tpu.dot_dimension_numbers<[1], [1], [0], [0], [0, 0, 1, 0], [], []>} : vector<8x8xbf16>, vector<16x8xbf16>, vector<8x16xf32> -> vector<8x16xf32>
    %196 = vector.broadcast %19 : vector<1x16xf32> to vector<8x16xf32>
    %197 = arith.addf %195, %196 : vector<8x16xf32>
    %cst_72 = arith.constant dense<0xFF800000> : vector<8xf32>
    %198 = vector.multi_reduction <maximumf>, %197, %cst_72 [1] : vector<8x16xf32> to vector<8xf32>
    %199 = vector.shape_cast %198 : vector<8xf32> to vector<8x1xf32>
    %200 = vector.broadcast %199 : vector<8x1xf32> to vector<8x16xf32>
    %201 = arith.subf %197, %200 : vector<8x16xf32>
    %202 = math.exp %201 : vector<8x16xf32>
    %cst_73 = arith.constant dense<0.000000e+00> : vector<8xf32>
    %203 = vector.multi_reduction <add>, %202, %cst_73 [1] : vector<8x16xf32> to vector<8xf32>
    %204 = vector.shape_cast %203 : vector<8xf32> to vector<8x1xf32>
    %205 = tpu.reciprocal %204 {approx = true} : vector<8x1xf32> -> vector<8x1xf32>
    %206 = vector.broadcast %205 : vector<8x1xf32> to vector<8x16xf32>
    %207 = arith.mulf %202, %206 : vector<8x16xf32>
    %208 = arith.truncf %207 : vector<8x16xf32> to vector<8x16xbf16>
    %cst_74 = arith.constant dense<0.000000e+00> : vector<8x8xf32>
    %209 = tpu.matmul %208, %194, %cst_74 {dimension_numbers = #tpu.dot_dimension_numbers<[1], [0], [0], [1], [0, 0, 1, 1], [], []>} : vector<8x16xbf16>, vector<16x8xbf16>, vector<8x8xf32> -> vector<8x8xf32>
    %210 = vector.extract_strided_slice %172 {offsets = [0, 16], sizes = [8, 8], strides = [1, 1]} : vector<8x32xbf16> to vector<8x8xbf16>
    %211 = vector.extract_strided_slice %173 {offsets = [0, 16], sizes = [16, 8], strides = [1, 1]} : vector<16x64xbf16> to vector<16x8xbf16>
    %212 = vector.extract_strided_slice %173 {offsets = [0, 48], sizes = [16, 8], strides = [1, 1]} : vector<16x64xbf16> to vector<16x8xbf16>
    %cst_75 = arith.constant dense<0.000000e+00> : vector<8x16xf32>
    %213 = tpu.matmul %210, %211, %cst_75 {dimension_numbers = #tpu.dot_dimension_numbers<[1], [1], [0], [0], [0, 0, 1, 0], [], []>} : vector<8x8xbf16>, vector<16x8xbf16>, vector<8x16xf32> -> vector<8x16xf32>
    %214 = vector.broadcast %19 : vector<1x16xf32> to vector<8x16xf32>
    %215 = arith.addf %213, %214 : vector<8x16xf32>
    %cst_76 = arith.constant dense<0xFF800000> : vector<8xf32>
    %216 = vector.multi_reduction <maximumf>, %215, %cst_76 [1] : vector<8x16xf32> to vector<8xf32>
    %217 = vector.shape_cast %216 : vector<8xf32> to vector<8x1xf32>
    %218 = vector.broadcast %217 : vector<8x1xf32> to vector<8x16xf32>
    %219 = arith.subf %215, %218 : vector<8x16xf32>
    %220 = math.exp %219 : vector<8x16xf32>
    %cst_77 = arith.constant dense<0.000000e+00> : vector<8xf32>
    %221 = vector.multi_reduction <add>, %220, %cst_77 [1] : vector<8x16xf32> to vector<8xf32>
    %222 = vector.shape_cast %221 : vector<8xf32> to vector<8x1xf32>
    %223 = tpu.reciprocal %222 {approx = true} : vector<8x1xf32> -> vector<8x1xf32>
    %224 = vector.broadcast %223 : vector<8x1xf32> to vector<8x16xf32>
    %225 = arith.mulf %220, %224 : vector<8x16xf32>
    %226 = arith.truncf %225 : vector<8x16xf32> to vector<8x16xbf16>
    %cst_78 = arith.constant dense<0.000000e+00> : vector<8x8xf32>
    %227 = tpu.matmul %226, %212, %cst_78 {dimension_numbers = #tpu.dot_dimension_numbers<[1], [0], [0], [1], [0, 0, 1, 1], [], []>} : vector<8x16xbf16>, vector<16x8xbf16>, vector<8x8xf32> -> vector<8x8xf32>
    %228 = vector.extract_strided_slice %172 {offsets = [0, 24], sizes = [8, 8], strides = [1, 1]} : vector<8x32xbf16> to vector<8x8xbf16>
    %229 = vector.extract_strided_slice %173 {offsets = [0, 24], sizes = [16, 8], strides = [1, 1]} : vector<16x64xbf16> to vector<16x8xbf16>
    %230 = vector.extract_strided_slice %173 {offsets = [0, 56], sizes = [16, 8], strides = [1, 1]} : vector<16x64xbf16> to vector<16x8xbf16>
    %cst_79 = arith.constant dense<0.000000e+00> : vector<8x16xf32>
    %231 = tpu.matmul %228, %229, %cst_79 {dimension_numbers = #tpu.dot_dimension_numbers<[1], [1], [0], [0], [0, 0, 1, 0], [], []>} : vector<8x8xbf16>, vector<16x8xbf16>, vector<8x16xf32> -> vector<8x16xf32>
    %232 = vector.broadcast %19 : vector<1x16xf32> to vector<8x16xf32>
    %233 = arith.addf %231, %232 : vector<8x16xf32>
    %cst_80 = arith.constant dense<0xFF800000> : vector<8xf32>
    %234 = vector.multi_reduction <maximumf>, %233, %cst_80 [1] : vector<8x16xf32> to vector<8xf32>
    %235 = vector.shape_cast %234 : vector<8xf32> to vector<8x1xf32>
    %236 = vector.broadcast %235 : vector<8x1xf32> to vector<8x16xf32>
    %237 = arith.subf %233, %236 : vector<8x16xf32>
    %238 = math.exp %237 : vector<8x16xf32>
    %cst_81 = arith.constant dense<0.000000e+00> : vector<8xf32>
    %239 = vector.multi_reduction <add>, %238, %cst_81 [1] : vector<8x16xf32> to vector<8xf32>
    %240 = vector.shape_cast %239 : vector<8xf32> to vector<8x1xf32>
    %241 = tpu.reciprocal %240 {approx = true} : vector<8x1xf32> -> vector<8x1xf32>
    %242 = vector.broadcast %241 : vector<8x1xf32> to vector<8x16xf32>
    %243 = arith.mulf %238, %242 : vector<8x16xf32>
    %244 = arith.truncf %243 : vector<8x16xf32> to vector<8x16xbf16>
    %cst_82 = arith.constant dense<0.000000e+00> : vector<8x8xf32>
    %245 = tpu.matmul %244, %230, %cst_82 {dimension_numbers = #tpu.dot_dimension_numbers<[1], [0], [0], [1], [0, 0, 1, 1], [], []>} : vector<8x16xbf16>, vector<16x8xbf16>, vector<8x8xf32> -> vector<8x8xf32>
    %246 = tpu.concatenate %191, %209, %227, %245 in 1 : vector<8x8xf32>, vector<8x8xf32>, vector<8x8xf32>, vector<8x8xf32> -> vector<8x32xf32>
    %247 = arith.truncf %246 : vector<8x32xf32> to vector<8x32xbf16>
    %cst_83 = arith.constant dense<0.000000e+00> : vector<8x32xf32>
    %248 = tpu.matmul %247, %162, %cst_83 {dimension_numbers = #tpu.dot_dimension_numbers<[1], [0], [0], [1], [0, 0, 1, 1], [], []>} : vector<8x32xbf16>, vector<32x32xbf16>, vector<8x32xf32> -> vector<8x32xf32>
    %249 = vector.broadcast %163 : vector<1x32xf32> to vector<8x32xf32>
    %250 = arith.addf %248, %249 : vector<8x32xf32>
    %251 = arith.addf %250, %133 : vector<8x32xf32>
    %252 = vector.extract_strided_slice %4 {offsets = [2, 0], sizes = [1, 32], strides = [1, 1]} : vector<3x32xf32> to vector<1x32xf32>
    %253 = vector.extract_strided_slice %5 {offsets = [2, 0], sizes = [1, 32], strides = [1, 1]} : vector<3x32xf32> to vector<1x32xf32>
    %cst_84 = arith.constant dense<0.000000e+00> : vector<8xf32>
    %254 = vector.multi_reduction <add>, %251, %cst_84 [1] : vector<8x32xf32> to vector<8xf32>
    %255 = vector.shape_cast %254 : vector<8xf32> to vector<8x1xf32>
    %cst_85 = arith.constant 3.200000e+01 : f32
    %256 = vector.broadcast %cst_85 : f32 to vector<8x1xf32>
    %257 = arith.divf %255, %256 : vector<8x1xf32>
    %258 = vector.broadcast %257 : vector<8x1xf32> to vector<8x32xf32>
    %259 = arith.subf %251, %258 : vector<8x32xf32>
    %260 = arith.mulf %259, %259 : vector<8x32xf32>
    %cst_86 = arith.constant dense<0.000000e+00> : vector<8xf32>
    %261 = vector.multi_reduction <add>, %260, %cst_86 [1] : vector<8x32xf32> to vector<8xf32>
    %262 = vector.shape_cast %261 : vector<8xf32> to vector<8x1xf32>
    %cst_87 = arith.constant 3.200000e+01 : f32
    %263 = vector.broadcast %cst_87 : f32 to vector<8x1xf32>
    %264 = arith.divf %262, %263 : vector<8x1xf32>
    %265 = vector.broadcast %257 : vector<8x1xf32> to vector<8x32xf32>
    %266 = arith.subf %251, %265 : vector<8x32xf32>
    %cst_88 = arith.constant 9.99999997E-7 : f32
    %267 = vector.broadcast %cst_88 : f32 to vector<8x1xf32>
    %268 = arith.addf %264, %267 : vector<8x1xf32>
    %269 = math.rsqrt %268 : vector<8x1xf32>
    %270 = vector.broadcast %269 : vector<8x1xf32> to vector<8x32xf32>
    %271 = arith.mulf %266, %270 : vector<8x32xf32>
    %272 = vector.broadcast %252 : vector<1x32xf32> to vector<8x32xf32>
    %273 = arith.mulf %271, %272 : vector<8x32xf32>
    %274 = vector.broadcast %253 : vector<1x32xf32> to vector<8x32xf32>
    %275 = arith.addf %273, %274 : vector<8x32xf32>
    %276 = arith.truncf %275 : vector<8x32xf32> to vector<8x32xbf16>
    %c0_89 = arith.constant 0 : index
    %c0_90 = arith.constant 0 : index
    %277 = vector.load %arg18[%c0_89, %c0_90] : memref<32x64xbf16, #tpu.memory_space<vmem>>, vector<32x64xbf16>
    %cst_91 = arith.constant dense<0.000000e+00> : vector<8x64xf32>
    %278 = tpu.matmul %276, %277, %cst_91 {dimension_numbers = #tpu.dot_dimension_numbers<[1], [0], [0], [1], [0, 0, 1, 1], [], []>} : vector<8x32xbf16>, vector<32x64xbf16>, vector<8x64xf32> -> vector<8x64xf32>
    %c0_92 = arith.constant 0 : index
    %c0_93 = arith.constant 0 : index
    %279 = vector.load %arg19[%c0_92, %c0_93] : memref<1x64xf32, #tpu.memory_space<vmem>>, vector<1x64xf32>
    %280 = vector.broadcast %279 : vector<1x64xf32> to vector<8x64xf32>
    %281 = arith.addf %278, %280 : vector<8x64xf32>
    %cst_94 = arith.constant 0.000000e+00 : f32
    %282 = vector.broadcast %cst_94 : f32 to vector<8x64xf32>
    %283 = arith.maximumf %281, %282 : vector<8x64xf32>
    %284 = arith.truncf %283 : vector<8x64xf32> to vector<8x64xbf16>
    %c0_95 = arith.constant 0 : index
    %c0_96 = arith.constant 0 : index
    %285 = vector.load %arg20[%c0_95, %c0_96] : memref<64x32xbf16, #tpu.memory_space<vmem>>, vector<64x32xbf16>
    %cst_97 = arith.constant dense<0.000000e+00> : vector<8x32xf32>
    %286 = tpu.matmul %284, %285, %cst_97 {dimension_numbers = #tpu.dot_dimension_numbers<[1], [0], [0], [1], [0, 0, 1, 1], [], []>} : vector<8x64xbf16>, vector<64x32xbf16>, vector<8x32xf32> -> vector<8x32xf32>
    %c0_98 = arith.constant 0 : index
    %c0_99 = arith.constant 0 : index
    %287 = vector.load %arg21[%c0_98, %c0_99] : memref<1x32xf32, #tpu.memory_space<vmem>>, vector<1x32xf32>
    %288 = vector.broadcast %287 : vector<1x32xf32> to vector<8x32xf32>
    %289 = arith.addf %286, %288 : vector<8x32xf32>
    %290 = arith.addf %289, %251 : vector<8x32xf32>
    %c0_100 = arith.constant 0 : index
    %c0_101 = arith.constant 0 : index
    %c0_102 = arith.constant 0 : index
    %291 = vector.load %arg22[%c0_100, %c0_101, %c0_102] : memref<1x8x32xf32, #tpu.memory_space<vmem>>, vector<1x8x32xf32>
    %292 = vector.shape_cast %291 : vector<1x8x32xf32> to vector<8x32xf32>
    %293 = vector.shape_cast %290 : vector<8x32xf32> to vector<1x8x32xf32>
    tpu.vector_store %arg22[%c0_100, %c0_101, %c0_102], %293 {strides = array<i32>} : memref<1x8x32xf32, #tpu.memory_space<vmem>>, vector<1x8x32xf32>,
    return
  }
  func.func @transform_0(%arg0: i32, %arg1: memref<2xi32, #tpu.memory_space<smem>>) -> (i32, i32, i32) {
    %c0_i32 = arith.constant 0 : i32
    %c0_i32_0 = arith.constant 0 : i32
    %c0_i32_1 = arith.constant 0 : i32
    return %arg0, %c0_i32, %c0_i32_0 : i32, i32, i32
  }
  func.func @transform_1(%arg0: i32, %arg1: memref<2xi32, #tpu.memory_space<smem>>) -> (i32, i32, i32) {
    %c0_i32 = arith.constant 0 : i32
    %c0_i32_0 = arith.constant 0 : i32
    %c0_i32_1 = arith.constant 0 : i32
    return %arg0, %c0_i32, %c0_i32_0 : i32, i32, i32
  }
  func.func @transform_2(%arg0: i32, %arg1: memref<2xi32, #tpu.memory_space<smem>>) -> (i32, i32) {
    %c0_i32 = arith.constant 0 : i32
    %c0_i32_0 = arith.constant 0 : i32
    %c0_i32_1 = arith.constant 0 : i32
    return %c0_i32, %c0_i32_0 : i32, i32
  }
  func.func @transform_3(%arg0: i32, %arg1: memref<2xi32, #tpu.memory_space<smem>>) -> (i32, i32) {
    %c0_i32 = arith.constant 0 : i32
    %c0_i32_0 = arith.constant 0 : i32
    %c0_i32_1 = arith.constant 0 : i32
    return %c0_i32, %c0_i32_0 : i32, i32
  }
  func.func @transform_4(%arg0: i32, %arg1: memref<2xi32, #tpu.memory_space<smem>>) -> (i32, i32) {
    %c0_i32 = arith.constant 0 : i32
    %c0_i32_0 = arith.constant 0 : i32
    %c0_i32_1 = arith.constant 0 : i32
    return %c0_i32, %c0_i32_0 : i32, i32
  }
  func.func @transform_5(%arg0: i32, %arg1: memref<2xi32, #tpu.memory_space<smem>>) -> (i32, i32) {
    %c0_i32 = arith.constant 0 : i32
    %c0_i32_0 = arith.constant 0 : i32
    %c0_i32_1 = arith.constant 0 : i32
    return %c0_i32, %c0_i32_0 : i32, i32
  }
  func.func @transform_6(%arg0: i32, %arg1: memref<2xi32, #tpu.memory_space<smem>>) -> (i32, i32) {
    %c0_i32 = arith.constant 0 : i32
    %c0_i32_0 = arith.constant 0 : i32
    %c0_i32_1 = arith.constant 0 : i32
    return %c0_i32, %c0_i32_0 : i32, i32
  }
  func.func @transform_7(%arg0: i32, %arg1: memref<2xi32, #tpu.memory_space<smem>>) -> (i32, i32) {
    %c0_i32 = arith.constant 0 : i32
    %c0_i32_0 = arith.constant 0 : i32
    %c0_i32_1 = arith.constant 0 : i32
    return %c0_i32, %c0_i32_0 : i32, i32
  }
  func.func @transform_8(%arg0: i32, %arg1: memref<2xi32, #tpu.memory_space<smem>>) -> (i32, i32) {
    %c0_i32 = arith.constant 0 : i32
    %c0_i32_0 = arith.constant 0 : i32
    %c0_i32_1 = arith.constant 0 : i32
    return %c0_i32, %c0_i32_0 : i32, i32
  }
  func.func @transform_9(%arg0: i32, %arg1: memref<2xi32, #tpu.memory_space<smem>>) -> (i32, i32) {
    %c0_i32 = arith.constant 0 : i32
    %c0_i32_0 = arith.constant 0 : i32
    %c0_i32_1 = arith.constant 0 : i32
    return %c0_i32, %c0_i32_0 : i32, i32
  }
  func.func @transform_10(%arg0: i32, %arg1: memref<2xi32, #tpu.memory_space<smem>>) -> (i32, i32) {
    %c0_i32 = arith.constant 0 : i32
    %c0_i32_0 = arith.constant 0 : i32
    %c0_i32_1 = arith.constant 0 : i32
    return %c0_i32, %c0_i32_0 : i32, i32
  }
  func.func @transform_11(%arg0: i32, %arg1: memref<2xi32, #tpu.memory_space<smem>>) -> (i32, i32) {
    %c0_i32 = arith.constant 0 : i32
    %c0_i32_0 = arith.constant 0 : i32
    %c0_i32_1 = arith.constant 0 : i32
    return %c0_i32, %c0_i32_0 : i32, i32
  }
  func.func @transform_12(%arg0: i32, %arg1: memref<2xi32, #tpu.memory_space<smem>>) -> (i32, i32) {
    %c0_i32 = arith.constant 0 : i32
    %c0_i32_0 = arith.constant 0 : i32
    %c0_i32_1 = arith.constant 0 : i32
    return %c0_i32, %c0_i32_0 : i32, i32
  }
  func.func @transform_13(%arg0: i32, %arg1: memref<2xi32, #tpu.memory_space<smem>>) -> (i32, i32) {
    %c0_i32 = arith.constant 0 : i32
    %c0_i32_0 = arith.constant 0 : i32
    %c0_i32_1 = arith.constant 0 : i32
    return %c0_i32, %c0_i32_0 : i32, i32
  }
  func.func @transform_14(%arg0: i32, %arg1: memref<2xi32, #tpu.memory_space<smem>>) -> (i32, i32) {
    %c0_i32 = arith.constant 0 : i32
    %c0_i32_0 = arith.constant 0 : i32
    %c0_i32_1 = arith.constant 0 : i32
    return %c0_i32, %c0_i32_0 : i32, i32
  }
  func.func @transform_15(%arg0: i32, %arg1: memref<2xi32, #tpu.memory_space<smem>>) -> (i32, i32) {
    %c0_i32 = arith.constant 0 : i32
    %c0_i32_0 = arith.constant 0 : i32
    %c0_i32_1 = arith.constant 0 : i32
    return %c0_i32, %c0_i32_0 : i32, i32
  }
  func.func @transform_16(%arg0: i32, %arg1: memref<2xi32, #tpu.memory_space<smem>>) -> (i32, i32) {
    %c0_i32 = arith.constant 0 : i32
    %c0_i32_0 = arith.constant 0 : i32
    %c0_i32_1 = arith.constant 0 : i32
    return %c0_i32, %c0_i32_0 : i32, i32
  }
  func.func @transform_17(%arg0: i32, %arg1: memref<2xi32, #tpu.memory_space<smem>>) -> (i32, i32) {
    %c0_i32 = arith.constant 0 : i32
    %c0_i32_0 = arith.constant 0 : i32
    %c0_i32_1 = arith.constant 0 : i32
    return %c0_i32, %c0_i32_0 : i32, i32
  }
  func.func @transform_18(%arg0: i32, %arg1: memref<2xi32, #tpu.memory_space<smem>>) -> (i32, i32) {
    %c0_i32 = arith.constant 0 : i32
    %c0_i32_0 = arith.constant 0 : i32
    %c0_i32_1 = arith.constant 0 : i32
    return %c0_i32, %c0_i32_0 : i32, i32
  }
  func.func @transform_19(%arg0: i32, %arg1: memref<2xi32, #tpu.memory_space<smem>>) -> (i32, i32) {
    %c0_i32 = arith.constant 0 : i32
    %c0_i32_0 = arith.constant 0 : i32
    %c0_i32_1 = arith.constant 0 : i32
    return %c0_i32, %c0_i32_0 : i32, i32
  }
  func.func @transform_20(%arg0: i32, %arg1: memref<2xi32, #tpu.memory_space<smem>>) -> (i32, i32, i32) {
    %c0_i32 = arith.constant 0 : i32
    %c0_i32_0 = arith.constant 0 : i32
    %c0_i32_1 = arith.constant 0 : i32
    return %arg0, %c0_i32, %c0_i32_0 : i32, i32, i32
  }
}

</mosaic_0001>

<llo_original>
// kernel: tpu_custom_call.1
$region0: #{tpu_custom_call.1}
  #allocation0 [shape = 'u32[]', space=smem, size = 0x4, offset = 0x4, fixed_abs, tag = 'smem constant byte address 0x4 - core index']
  #allocation1 [shape = 'u32[72,128]{1,0:T(1,128)}', space=vmem, size = 0x9000, scoped, tag = 'internal scratch']
  #allocation2 [shape = 's32[1]{0}', space=sflag, size = 0x4, scoped, tag = 'scoped memory for tpu_custom_call.1']
  #allocation3 [shape = 'u8[512]{0}', space=smem, size = 0x200, scoped, tag = 'prefetched SMEM operand 0']
  %s0 = inlined_call_operand.vmem [shape: s32[2], index: 0, kind: input, shape index: {}]
  %s1 = inlined_call_operand.vmem [shape: f32[2,8,32], index: 1, kind: input, shape index: {}]
  %s2 = inlined_call_operand.vmem [shape: f32[2,16,32], index: 2, kind: input, shape index: {}]
  %s3 = inlined_call_operand.hbm [shape: f32[3,32], index: 3, kind: input, shape index: {}]
  %s4 = inlined_call_operand.hbm [shape: f32[3,32], index: 4, kind: input, shape index: {}]
  %s5 = inlined_call_operand.hbm [shape: bf16[32,32], index: 5, kind: input, shape index: {}]
  %s6 = inlined_call_operand.vmem [shape: f32[1,32], index: 6, kind: input, shape index: {}]
  %s7 = inlined_call_operand.hbm [shape: bf16[32,64], index: 7, kind: input, shape index: {}]
  %s8 = inlined_call_operand.hbm [shape: f32[1,64], index: 8, kind: input, shape index: {}]
  %s9 = inlined_call_operand.hbm [shape: bf16[32,32], index: 9, kind: input, shape index: {}]
  %s10 = inlined_call_operand.hbm [shape: f32[1,32], index: 10, kind: input, shape index: {}]
  %s11 = inlined_call_operand.hbm [shape: bf16[32,32], index: 11, kind: input, shape index: {}]
  %s12 = inlined_call_operand.hbm [shape: f32[1,32], index: 12, kind: input, shape index: {}]
  %s13 = inlined_call_operand.hbm [shape: bf16[32,64], index: 13, kind: input, shape index: {}]
  %s14 = inlined_call_operand.hbm [shape: f32[1,64], index: 14, kind: input, shape index: {}]
  %s15 = inlined_call_operand.hbm [shape: bf16[32,32], index: 15, kind: input, shape index: {}]
  %s16 = inlined_call_operand.hbm [shape: f32[1,32], index: 16, kind: input, shape index: {}]
  %s17 = inlined_call_operand.hbm [shape: bf16[32,64], index: 17, kind: input, shape index: {}]
  %s18 = inlined_call_operand.hbm [shape: f32[1,64], index: 18, kind: input, shape index: {}]
  %s19 = inlined_call_operand.vmem [shape: bf16[64,32], index: 19, kind: input, shape index: {}]
  %s20 = inlined_call_operand.vmem [shape: f32[1,32], index: 20, kind: input, shape index: {}]
  %s21 = inlined_call_operand.hbm [shape: f32[2,8,32], index: 21, kind: output, shape index: {}]
  %s22 = sld [smem:[#allocation0]]
  $region173: #{tpu_custom_call.1} parent=0
    _
  %s24 = ssub.s32 1, %s22
  %s25 = scalar_select 0, %s24, %s22
  %s27 = sshll.u32 %s0, 4
  %s28 = int_to_ptr.vmem [resolvable:$true] %s27
  %30 = dma.vmem_to_smem %s28, 16, [#allocation3], [#allocation2]
  %32 = dma.done [#allocation2], 16
  %33 = sfence
  $region1: #{tpu_custom_call.1} parent=0
    #allocation4 [shape = 'u8[2048]{0}', space=vmem, size = 0x800, scoped, tag = 'input window, operand 3, single buffered']
    #allocation5 [shape = 's32[2]{0}', space=sflag, size = 0x8, scoped, tag = 'scoped memory for tpu_custom_call.1']
    #allocation6 [shape = 's32[2]{0}', space=sflag, size = 0x8, scoped, tag = 'scoped memory for tpu_custom_call.1']
    #allocation7 [shape = 'u8[2048]{0}', space=vmem, size = 0x800, scoped, tag = 'input window, operand 4, single buffered']
    #allocation8 [shape = 's32[1]{0}', space=sflag, size = 0x4, scoped, tag = 'scoped memory for tpu_custom_call.1']
    #allocation9 [shape = 'u8[8192]{0}', space=vmem, size = 0x2000, scoped, tag = 'input window, operand 5, single buffered']
    #allocation10 [shape = 'u8[8192]{0}', space=vmem, size = 0x2000, scoped, tag = 'input window, operand 7, single buffered']
    #allocation11 [shape = 's32[1]{0}', space=sflag, size = 0x4, scoped, tag = 'scoped memory for tpu_custom_call.1']
    #allocation12 [shape = 'u8[512]{0}', space=vmem, size = 0x400, scoped, tag = 'input window, operand 8, single buffered']
    #allocation13 [shape = 'u8[8192]{0}', space=vmem, size = 0x2000, scoped, tag = 'input window, operand 9, single buffered']
    #allocation14 [shape = 's32[1]{0}', space=sflag, size = 0x4, scoped, tag = 'scoped memory for tpu_custom_call.1']
    #allocation15 [shape = 'u8[512]{0}', space=vmem, size = 0x400, scoped, tag = 'input window, operand 10, single buffered']
    #allocation16 [shape = 'u8[8192]{0}', space=vmem, size = 0x2000, scoped, tag = 'input window, operand 11, single buffered']
    #allocation17 [shape = 's32[1]{0}', space=sflag, size = 0x4, scoped, tag = 'scoped memory for tpu_custom_call.1']
    #allocation18 [shape = 'u8[512]{0}', space=vmem, size = 0x400, scoped, tag = 'input window, operand 12, single buffered']
    #allocation19 [shape = 'u8[8192]{0}', space=vmem, size = 0x2000, scoped, tag = 'input window, operand 13, single buffered']
    #allocation20 [shape = 's32[1]{0}', space=sflag, size = 0x4, scoped, tag = 'scoped memory for tpu_custom_call.1']
    #allocation21 [shape = 'u8[512]{0}', space=vmem, size = 0x400, scoped, tag = 'input window, operand 14, single buffered']
    #allocation22 [shape = 'u8[8192]{0}', space=vmem, size = 0x2000, scoped, tag = 'input window, operand 15, single buffered']
    #allocation23 [shape = 's32[1]{0}', space=sflag, size = 0x4, scoped, tag = 'scoped memory for tpu_custom_call.1']
    #allocation24 [shape = 'u8[512]{0}', space=vmem, size = 0x400, scoped, tag = 'input window, operand 16, single buffered']
    #allocation25 [shape = 'u8[8192]{0}', space=vmem, size = 0x2000, scoped, tag = 'input window, operand 17, single buffered']
    #allocation26 [shape = 's32[1]{0}', space=sflag, size = 0x4, scoped, tag = 'scoped memory for tpu_custom_call.1']
    #allocation27 [shape = 'u8[512]{0}', space=vmem, size = 0x400, scoped, tag = 'input window, operand 18, single buffered']
    #allocation28 [shape = 'u8[8192]{0}', space=vmem, size = 0x2000, scoped, tag = 'output window, operand 0']
    %34 = vsyncpa [#allocation5], 0
    %35 = vsyncpa [#allocation8], 0
    %36 = vsyncpa [#allocation11], 0
    %37 = vsyncpa [#allocation14], 0
    %38 = vsyncpa [#allocation17], 0
    %39 = vsyncpa [#allocation20], 0
    %40 = vsyncpa [#allocation23], 0
    %41 = vsyncpa [#allocation26], 0
    %42 = vsyncpa [#allocation6], 0
    %s43 = scalar_lea.sflag [#allocation6], 1
    %44 = vsyncpa %s43, 0
    loop: start=0, step=1, limit=4
    $region2: #{tpu_custom_call.1} parent=1 // loop_pre_header
      _
    $region3: #{tpu_custom_call.1} parent=1 // loop_header
      %s46 = sphi 0, %s50
      %p47 = scmp.ge.s32.totalorder %s46, 4
      %s56 = sphi 0, %s58
      %s59 = sphi 0, %s56
      %s60 = sphi 0, %s59
      %s76 = sphi 0, %s60
      %s82 = sphi 0, %s84
      %s85 = sphi 0, %s82
      %s86 = sphi 0, %s85
      %s102 = sphi 0, %s86
      %s106 = sphi 0, %s106
      %s108 = sphi 0, %s106
      %s109 = sphi 0, %s108
      %s123 = sphi 0, %s109
      %s127 = sphi 0, %s127
      %s129 = sphi 0, %s127
      %s130 = sphi 0, %s129
      %s144 = sphi 0, %s130
      %s148 = sphi 0, %s148
      %s150 = sphi 0, %s148
      %s151 = sphi 0, %s150
      %s165 = sphi 0, %s151
      %s169 = sphi 0, %s169
      %s171 = sphi 0, %s169
      %s172 = sphi 0, %s171
      %s186 = sphi 0, %s172
      %s190 = sphi 0, %s190
      %s192 = sphi 0, %s190
      %s193 = sphi 0, %s192
      %s207 = sphi 0, %s193
      %s211 = sphi 0, %s211
      %s213 = sphi 0, %s211
      %s214 = sphi 0, %s213
      %s228 = sphi 0, %s214
      %s232 = sphi 0, %s232
      %s234 = sphi 0, %s232
      %s235 = sphi 0, %s234
      %s249 = sphi 0, %s235
      %s253 = sphi 0, %s253
      %s255 = sphi 0, %s253
      %s256 = sphi 0, %s255
      %s270 = sphi 0, %s256
      %s274 = sphi 0, %s274
      %s276 = sphi 0, %s274
      %s277 = sphi 0, %s276
      %s291 = sphi 0, %s277
      %s295 = sphi 0, %s295
      %s297 = sphi 0, %s295
      %s298 = sphi 0, %s297
      %s312 = sphi 0, %s298
      %s316 = sphi 0, %s316
      %s318 = sphi 0, %s316
      %s319 = sphi 0, %s318
      %s333 = sphi 0, %s319
      %s337 = sphi 0, %s337
      %s339 = sphi 0, %s337
      %s340 = sphi 0, %s339
      %s354 = sphi 0, %s340
      %s358 = sphi 0, %s358
      %s360 = sphi 0, %s358
      %s361 = sphi 0, %s360
      %s375 = sphi 0, %s361
      %s379 = sphi 0, %s379
      %s381 = sphi 0, %s379
      %s382 = sphi 0, %s381
      %s396 = sphi 0, %s382
      %s400 = sphi 0, %s400
      %s402 = sphi 0, %s400
      %s403 = sphi 0, %s402
      %s417 = sphi 0, %s403
      %s421 = sphi 0, %s421
      %s423 = sphi 0, %s421
      %s424 = sphi 0, %s423
      %s438 = sphi 0, %s424
      %s442 = sphi 0, %s442
      %s444 = sphi 0, %s442
      %s445 = sphi 0, %s444
      %s459 = sphi 0, %s445
      %s463 = sphi 0, %s463
      %s465 = sphi 0, %s463
      %s466 = sphi 0, %s465
      %s480 = sphi 0, %s466
      %s486 = sphi 0, %s488
      %s489 = sphi 0, %s486
      %s490 = sphi 0, %s489
      %s506 = sphi 0, %s490
    $region4: #{tpu_custom_call.1} parent=1 // loop_header_branch
      %49 = sbr.rel (%p47) target = $region8
    $region5: #{tpu_custom_call.1} parent=1 // loop_body
      %s51 = ssub.s32 %s46, 1
      %s52 = ssub.s32 %s46, 2
      %s53 = sadd.s32 %s46, 1
      %s54 = ssub.s32 %s46, %s53
      %p55 = scmp.eq.s32.totalorder %s54, 0
      %s57 = sadd.s32 %s56, 1
      %s58 = scalar_select %p55, %s56, %s57
      %p61 = pneg %p55
      %p62 = scmp.eq.s32.totalorder %s46, 1
      %p63 = por %p61, %p62
      %p64 = scmp.ne.s32.totalorder %s56, %s59
      %p65 = scmp.eq.s32.totalorder %s46, 0
      %p66 = por %p64, %p65
      %p67 = scmp.ne.s32.totalorder %s56, %s59
      %p68 = scmp.eq.s32.totalorder %s51, 1
      %p69 = por %p67, %p68
      %p70 = scmp.ne.s32.totalorder %s59, %s60
      %p71 = scmp.eq.s32.totalorder %s51, 0
      %p72 = por %p70, %p71
      %p73 = scmp.ne.s32.totalorder %s59, %s60
      %p74 = scmp.eq.s32.totalorder %s52, 1
      %p75 = por %p73, %p74
      %p77 = scmp.ne.s32.totalorder %s60, %s76
      %p78 = scmp.eq.s32.totalorder %s52, 0
      %p79 = por %p77, %p78
      %s80 = ssub.s32 %s46, %s53
      %p81 = scmp.eq.s32.totalorder %s80, 0
      %s83 = sadd.s32 %s82, 1
      %s84 = scalar_select %p81, %s82, %s83
      %p87 = pneg %p81
      %p88 = scmp.eq.s32.totalorder %s46, 1
      %p89 = por %p87, %p88
      %p90 = scmp.ne.s32.totalorder %s82, %s85
      %p91 = scmp.eq.s32.totalorder %s46, 0
      %p92 = por %p90, %p91
      %p93 = scmp.ne.s32.totalorder %s82, %s85
      %p94 = scmp.eq.s32.totalorder %s51, 1
      %p95 = por %p93, %p94
      %p96 = scmp.ne.s32.totalorder %s85, %s86
      %p97 = scmp.eq.s32.totalorder %s51, 0
      %p98 = por %p96, %p97
      %p99 = scmp.ne.s32.totalorder %s85, %s86
      %p100 = scmp.eq.s32.totalorder %s52, 1
      %p101 = por %p99, %p100
      %p103 = scmp.ne.s32.totalorder %s86, %s102
      %p104 = scmp.eq.s32.totalorder %s52, 0
      %p105 = por %p103, %p104
      %s107 = sadd.s32 %s106, 1
      %p110 = scmp.eq.s32.totalorder %s46, 1
      %p111 = scmp.ne.s32.totalorder %s106, %s108
      %p112 = scmp.eq.s32.totalorder %s46, 0
      %p113 = por %p111, %p112
      %p114 = scmp.ne.s32.totalorder %s106, %s108
      %p115 = scmp.eq.s32.totalorder %s51, 1
      %p116 = por %p114, %p115
      %p117 = scmp.ne.s32.totalorder %s108, %s109
      %p118 = scmp.eq.s32.totalorder %s51, 0
      %p119 = por %p117, %p118
      %p120 = scmp.ne.s32.totalorder %s108, %s109
      %p121 = scmp.eq.s32.totalorder %s52, 1
      %p122 = por %p120, %p121
      %p124 = scmp.ne.s32.totalorder %s109, %s123
      %p125 = scmp.eq.s32.totalorder %s52, 0
      %p126 = por %p124, %p125
      %s128 = sadd.s32 %s127, 1
      %p131 = scmp.eq.s32.totalorder %s46, 1
      %p132 = scmp.ne.s32.totalorder %s127, %s129
      %p133 = scmp.eq.s32.totalorder %s46, 0
      %p134 = por %p132, %p133
      %p135 = scmp.ne.s32.totalorder %s127, %s129
      %p136 = scmp.eq.s32.totalorder %s51, 1
      %p137 = por %p135, %p136
      %p138 = scmp.ne.s32.totalorder %s129, %s130
      %p139 = scmp.eq.s32.totalorder %s51, 0
      %p140 = por %p138, %p139
      %p141 = scmp.ne.s32.totalorder %s129, %s130
      %p142 = scmp.eq.s32.totalorder %s52, 1
      %p143 = por %p141, %p142
      %p145 = scmp.ne.s32.totalorder %s130, %s144
      %p146 = scmp.eq.s32.totalorder %s52, 0
      %p147 = por %p145, %p146
      %s149 = sadd.s32 %s148, 1
      %p152 = scmp.eq.s32.totalorder %s46, 1
      %p153 = scmp.ne.s32.totalorder %s148, %s150
      %p154 = scmp.eq.s32.totalorder %s46, 0
      %p155 = por %p153, %p154
      %p156 = scmp.ne.s32.totalorder %s148, %s150
      %p157 = scmp.eq.s32.totalorder %s51, 1
      %p158 = por %p156, %p157
      %p159 = scmp.ne.s32.totalorder %s150, %s151
      %p160 = scmp.eq.s32.totalorder %s51, 0
      %p161 = por %p159, %p160
      %p162 = scmp.ne.s32.totalorder %s150, %s151
      %p163 = scmp.eq.s32.totalorder %s52, 1
      %p164 = por %p162, %p163
      %p166 = scmp.ne.s32.totalorder %s151, %s165
      %p167 = scmp.eq.s32.totalorder %s52, 0
      %p168 = por %p166, %p167
      %s170 = sadd.s32 %s169, 1
      %p173 = scmp.eq.s32.totalorder %s46, 1
      %p174 = scmp.ne.s32.totalorder %s169, %s171
      %p175 = scmp.eq.s32.totalorder %s46, 0
      %p176 = por %p174, %p175
      %p177 = scmp.ne.s32.totalorder %s169, %s171
      %p178 = scmp.eq.s32.totalorder %s51, 1
      %p179 = por %p177, %p178
      %p180 = scmp.ne.s32.totalorder %s171, %s172
      %p181 = scmp.eq.s32.totalorder %s51, 0
      %p182 = por %p180, %p181
      %p183 = scmp.ne.s32.totalorder %s171, %s172
      %p184 = scmp.eq.s32.totalorder %s52, 1
      %p185 = por %p183, %p184
      %p187 = scmp.ne.s32.totalorder %s172, %s186
      %p188 = scmp.eq.s32.totalorder %s52, 0
      %p189 = por %p187, %p188
      %s191 = sadd.s32 %s190, 1
      %p194 = scmp.eq.s32.totalorder %s46, 1
      %p195 = scmp.ne.s32.totalorder %s190, %s192
      %p196 = scmp.eq.s32.totalorder %s46, 0
      %p197 = por %p195, %p196
      %p198 = scmp.ne.s32.totalorder %s190, %s192
      %p199 = scmp.eq.s32.totalorder %s51, 1
      %p200 = por %p198, %p199
      %p201 = scmp.ne.s32.totalorder %s192, %s193
      %p202 = scmp.eq.s32.totalorder %s51, 0
      %p203 = por %p201, %p202
      %p204 = scmp.ne.s32.totalorder %s192, %s193
      %p205 = scmp.eq.s32.totalorder %s52, 1
      %p206 = por %p204, %p205
      %p208 = scmp.ne.s32.totalorder %s193, %s207
      %p209 = scmp.eq.s32.totalorder %s52, 0
      %p210 = por %p208, %p209
      %s212 = sadd.s32 %s211, 1
      %p215 = scmp.eq.s32.totalorder %s46, 1
      %p216 = scmp.ne.s32.totalorder %s211, %s213
      %p217 = scmp.eq.s32.totalorder %s46, 0
      %p218 = por %p216, %p217
      %p219 = scmp.ne.s32.totalorder %s211, %s213
      %p220 = scmp.eq.s32.totalorder %s51, 1
      %p221 = por %p219, %p220
      %p222 = scmp.ne.s32.totalorder %s213, %s214
      %p223 = scmp.eq.s32.totalorder %s51, 0
      %p224 = por %p222, %p223
      %p225 = scmp.ne.s32.totalorder %s213, %s214
      %p226 = scmp.eq.s32.totalorder %s52, 1
      %p227 = por %p225, %p226
      %p229 = scmp.ne.s32.totalorder %s214, %s228
      %p230 = scmp.eq.s32.totalorder %s52, 0
      %p231 = por %p229, %p230
      %s233 = sadd.s32 %s232, 1
      %p236 = scmp.eq.s32.totalorder %s46, 1
      %p237 = scmp.ne.s32.totalorder %s232, %s234
      %p238 = scmp.eq.s32.totalorder %s46, 0
      %p239 = por %p237, %p238
      %p240 = scmp.ne.s32.totalorder %s232, %s234
      %p241 = scmp.eq.s32.totalorder %s51, 1
      %p242 = por %p240, %p241
      %p243 = scmp.ne.s32.totalorder %s234, %s235
      %p244 = scmp.eq.s32.totalorder %s51, 0
      %p245 = por %p243, %p244
      %p246 = scmp.ne.s32.totalorder %s234, %s235
      %p247 = scmp.eq.s32.totalorder %s52, 1
      %p248 = por %p246, %p247
      %p250 = scmp.ne.s32.totalorder %s235, %s249
      %p251 = scmp.eq.s32.totalorder %s52, 0
      %p252 = por %p250, %p251
      %s254 = sadd.s32 %s253, 1
      %p257 = scmp.eq.s32.totalorder %s46, 1
      %p258 = scmp.ne.s32.totalorder %s253, %s255
      %p259 = scmp.eq.s32.totalorder %s46, 0
      %p260 = por %p258, %p259
      %p261 = scmp.ne.s32.totalorder %s253, %s255
      %p262 = scmp.eq.s32.totalorder %s51, 1
      %p263 = por %p261, %p262
      %p264 = scmp.ne.s32.totalorder %s255, %s256
      %p265 = scmp.eq.s32.totalorder %s51, 0
      %p266 = por %p264, %p265
      %p267 = scmp.ne.s32.totalorder %s255, %s256
      %p268 = scmp.eq.s32.totalorder %s52, 1
      %p269 = por %p267, %p268
      %p271 = scmp.ne.s32.totalorder %s256, %s270
      %p272 = scmp.eq.s32.totalorder %s52, 0
      %p273 = por %p271, %p272
      %s275 = sadd.s32 %s274, 1
      %p278 = scmp.eq.s32.totalorder %s46, 1
      %p279 = scmp.ne.s32.totalorder %s274, %s276
      %p280 = scmp.eq.s32.totalorder %s46, 0
      %p281 = por %p279, %p280
      %p282 = scmp.ne.s32.totalorder %s274, %s276
      %p283 = scmp.eq.s32.totalorder %s51, 1
      %p284 = por %p282, %p283
      %p285 = scmp.ne.s32.totalorder %s276, %s277
      %p286 = scmp.eq.s32.totalorder %s51, 0
      %p287 = por %p285, %p286
      %p288 = scmp.ne.s32.totalorder %s276, %s277
      %p289 = scmp.eq.s32.totalorder %s52, 1
      %p290 = por %p288, %p289
      %p292 = scmp.ne.s32.totalorder %s277, %s291
      %p293 = scmp.eq.s32.totalorder %s52, 0
      %p294 = por %p292, %p293
      %s296 = sadd.s32 %s295, 1
      %p299 = scmp.eq.s32.totalorder %s46, 1
      %p300 = scmp.ne.s32.totalorder %s295, %s297
      %p301 = scmp.eq.s32.totalorder %s46, 0
      %p302 = por %p300, %p301
      %p303 = scmp.ne.s32.totalorder %s295, %s297
      %p304 = scmp.eq.s32.totalorder %s51, 1
      %p305 = por %p303, %p304
      %p306 = scmp.ne.s32.totalorder %s297, %s298
      %p307 = scmp.eq.s32.totalorder %s51, 0
      %p308 = por %p306, %p307
      %p309 = scmp.ne.s32.totalorder %s297, %s298
      %p310 = scmp.eq.s32.totalorder %s52, 1
      %p311 = por %p309, %p310
      %p313 = scmp.ne.s32.totalorder %s298, %s312
      %p314 = scmp.eq.s32.totalorder %s52, 0
      %p315 = por %p313, %p314
      %s317 = sadd.s32 %s316, 1
      %p320 = scmp.eq.s32.totalorder %s46, 1
      %p321 = scmp.ne.s32.totalorder %s316, %s318
      %p322 = scmp.eq.s32.totalorder %s46, 0
      %p323 = por %p321, %p322
      %p324 = scmp.ne.s32.totalorder %s316, %s318
      %p325 = scmp.eq.s32.totalorder %s51, 1
      %p326 = por %p324, %p325
      %p327 = scmp.ne.s32.totalorder %s318, %s319
      %p328 = scmp.eq.s32.totalorder %s51, 0
      %p329 = por %p327, %p328
      %p330 = scmp.ne.s32.totalorder %s318, %s319
      %p331 = scmp.eq.s32.totalorder %s52, 1
      %p332 = por %p330, %p331
      %p334 = scmp.ne.s32.totalorder %s319, %s333
      %p335 = scmp.eq.s32.totalorder %s52, 0
      %p336 = por %p334, %p335
      %s338 = sadd.s32 %s337, 1
      %p341 = scmp.eq.s32.totalorder %s46, 1
      %p342 = scmp.ne.s32.totalorder %s337, %s339
      %p343 = scmp.eq.s32.totalorder %s46, 0
      %p344 = por %p342, %p343
      %p345 = scmp.ne.s32.totalorder %s337, %s339
      %p346 = scmp.eq.s32.totalorder %s51, 1
      %p347 = por %p345, %p346
      %p348 = scmp.ne.s32.totalorder %s339, %s340
      %p349 = scmp.eq.s32.totalorder %s51, 0
      %p350 = por %p348, %p349
      %p351 = scmp.ne.s32.totalorder %s339, %s340
      %p352 = scmp.eq.s32.totalorder %s52, 1
      %p353 = por %p351, %p352
      %p355 = scmp.ne.s32.totalorder %s340, %s354
      %p356 = scmp.eq.s32.totalorder %s52, 0
      %p357 = por %p355, %p356
      %s359 = sadd.s32 %s358, 1
      %p362 = scmp.eq.s32.totalorder %s46, 1
      %p363 = scmp.ne.s32.totalorder %s358, %s360
      %p364 = scmp.eq.s32.totalorder %s46, 0
      %p365 = por %p363, %p364
      %p366 = scmp.ne.s32.totalorder %s358, %s360
      %p367 = scmp.eq.s32.totalorder %s51, 1
      %p368 = por %p366, %p367
      %p369 = scmp.ne.s32.totalorder %s360, %s361
      %p370 = scmp.eq.s32.totalorder %s51, 0
      %p371 = por %p369, %p370
      %p372 = scmp.ne.s32.totalorder %s360, %s361
      %p373 = scmp.eq.s32.totalorder %s52, 1
      %p374 = por %p372, %p373
      %p376 = scmp.ne.s32.totalorder %s361, %s375
      %p377 = scmp.eq.s32.totalorder %s52, 0
      %p378 = por %p376, %p377
      %s380 = sadd.s32 %s379, 1
      %p383 = scmp.eq.s32.totalorder %s46, 1
      %p384 = scmp.ne.s32.totalorder %s379, %s381
      %p385 = scmp.eq.s32.totalorder %s46, 0
      %p386 = por %p384, %p385
      %p387 = scmp.ne.s32.totalorder %s379, %s381
      %p388 = scmp.eq.s32.totalorder %s51, 1
      %p389 = por %p387, %p388
      %p390 = scmp.ne.s32.totalorder %s381, %s382
      %p391 = scmp.eq.s32.totalorder %s51, 0
      %p392 = por %p390, %p391
      %p393 = scmp.ne.s32.totalorder %s381, %s382
      %p394 = scmp.eq.s32.totalorder %s52, 1
      %p395 = por %p393, %p394
      %p397 = scmp.ne.s32.totalorder %s382, %s396
      %p398 = scmp.eq.s32.totalorder %s52, 0
      %p399 = por %p397, %p398
      %s401 = sadd.s32 %s400, 1
      %p404 = scmp.eq.s32.totalorder %s46, 1
      %p405 = scmp.ne.s32.totalorder %s400, %s402
      %p406 = scmp.eq.s32.totalorder %s46, 0
      %p407 = por %p405, %p406
      %p408 = scmp.ne.s32.totalorder %s400, %s402
      %p409 = scmp.eq.s32.totalorder %s51, 1
      %p410 = por %p408, %p409
      %p411 = scmp.ne.s32.totalorder %s402, %s403
      %p412 = scmp.eq.s32.totalorder %s51, 0
      %p413 = por %p411, %p412
      %p414 = scmp.ne.s32.totalorder %s402, %s403
      %p415 = scmp.eq.s32.totalorder %s52, 1
      %p416 = por %p414, %p415
      %p418 = scmp.ne.s32.totalorder %s403, %s417
      %p419 = scmp.eq.s32.totalorder %s52, 0
      %p420 = por %p418, %p419
      %s422 = sadd.s32 %s421, 1
      %p425 = scmp.eq.s32.totalorder %s46, 1
      %p426 = scmp.ne.s32.totalorder %s421, %s423
      %p427 = scmp.eq.s32.totalorder %s46, 0
      %p428 = por %p426, %p427
      %p429 = scmp.ne.s32.totalorder %s421, %s423
      %p430 = scmp.eq.s32.totalorder %s51, 1
      %p431 = por %p429, %p430
      %p432 = scmp.ne.s32.totalorder %s423, %s424
      %p433 = scmp.eq.s32.totalorder %s51, 0
      %p434 = por %p432, %p433
      %p435 = scmp.ne.s32.totalorder %s423, %s424
      %p436 = scmp.eq.s32.totalorder %s52, 1
      %p437 = por %p435, %p436
      %p439 = scmp.ne.s32.totalorder %s424, %s438
      %p440 = scmp.eq.s32.totalorder %s52, 0
      %p441 = por %p439, %p440
      %s443 = sadd.s32 %s442, 1
      %p446 = scmp.eq.s32.totalorder %s46, 1
      %p447 = scmp.ne.s32.totalorder %s442, %s444
      %p448 = scmp.eq.s32.totalorder %s46, 0
      %p449 = por %p447, %p448
      %p450 = scmp.ne.s32.totalorder %s442, %s444
      %p451 = scmp.eq.s32.totalorder %s51, 1
      %p452 = por %p450, %p451
      %p453 = scmp.ne.s32.totalorder %s444, %s445
      %p454 = scmp.eq.s32.totalorder %s51, 0
      %p455 = por %p453, %p454
      %p456 = scmp.ne.s32.totalorder %s444, %s445
      %p457 = scmp.eq.s32.totalorder %s52, 1
      %p458 = por %p456, %p457
      %p460 = scmp.ne.s32.totalorder %s445, %s459
      %p461 = scmp.eq.s32.totalorder %s52, 0
      %p462 = por %p460, %p461
      %s464 = sadd.s32 %s463, 1
      %p467 = scmp.eq.s32.totalorder %s46, 1
      %p468 = scmp.ne.s32.totalorder %s463, %s465
      %p469 = scmp.eq.s32.totalorder %s46, 0
      %p470 = por %p468, %p469
      %p471 = scmp.ne.s32.totalorder %s463, %s465
      %p472 = scmp.eq.s32.totalorder %s51, 1
      %p473 = por %p471, %p472
      %p474 = scmp.ne.s32.totalorder %s465, %s466
      %p475 = scmp.eq.s32.totalorder %s51, 0
      %p476 = por %p474, %p475
      %p477 = scmp.ne.s32.totalorder %s465, %s466
      %p478 = scmp.eq.s32.totalorder %s52, 1
      %p479 = por %p477, %p478
      %p481 = scmp.ne.s32.totalorder %s466, %s480
      %p482 = scmp.eq.s32.totalorder %s52, 0
      %p483 = por %p481, %p482
      %s484 = ssub.s32 %s46, %s53
      %p485 = scmp.eq.s32.totalorder %s484, 0
      %s487 = sadd.s32 %s486, 1
      %s488 = scalar_select %p485, %s486, %s487
      %p491 = pneg %p485
      %p492 = scmp.eq.s32.totalorder %s46, 1
      %p493 = por %p491, %p492
      %p494 = scmp.ne.s32.totalorder %s486, %s489
      %p495 = scmp.eq.s32.totalorder %s46, 0
      %p496 = por %p494, %p495
      %p497 = scmp.ne.s32.totalorder %s486, %s489
      %p498 = scmp.eq.s32.totalorder %s51, 1
      %p499 = por %p497, %p498
      %p500 = scmp.ne.s32.totalorder %s489, %s490
      %p501 = scmp.eq.s32.totalorder %s51, 0
      %p502 = por %p500, %p501
      %p503 = scmp.ne.s32.totalorder %s489, %s490
      %p504 = scmp.eq.s32.totalorder %s52, 1
      %p505 = por %p503, %p504
      %p507 = scmp.ne.s32.totalorder %s490, %s506
      %p508 = scmp.eq.s32.totalorder %s52, 0
      %p509 = por %p507, %p508
      %p510 = scmp.le.s32.totalorder 1, %s46
      %p511 = scmp.lt.s32.totalorder %s46, 3
      %p512 = pnand %p510, %p511
      %p513 = pneg %p512
      // Predicated region
      $region9: #{tpu_custom_call.1} parent=5 // pred_check
        _
      $region10: #{tpu_custom_call.1} parent=5 // pred_check_branch
        %515 = sbr.rel (%p512) target = $region12
      $region11: #{tpu_custom_call.1} parent=5 // pred_region
        %s516 = ssub.s32 %s46, 1
        // Predicated region
        $region13: #{tpu_custom_call.1} parent=11 // pred_check
          %p517 = pneg %p119
        $region14: #{tpu_custom_call.1} parent=11 // pred_check_branch
          %519 = sbr.rel (%p517) target = $region16
        $region15: #{tpu_custom_call.1} parent=11 // pred_region
          %521 = vsyncadd [#allocation5], 0
          %s523 = sshll.u32 %s3, 4
          %s524 = int_to_ptr.hbm [resolvable:$true] %s523
          %s525 = sshll.u32 [#allocation4], 4
          %s526 = int_to_ptr.vmem [resolvable:$true] %s525
          %528 = dma.hbm_to_vmem [thread:$0]  %s524, 64, %s526, [#allocation5]
        $region16: #{tpu_custom_call.1} parent=11 // pred_fallthru
          _
        // Predicated region
        $region17: #{tpu_custom_call.1} parent=11 // pred_check
          %p529 = pneg %p140
        $region18: #{tpu_custom_call.1} parent=11 // pred_check_branch
          %531 = sbr.rel (%p529) target = $region20
        $region19: #{tpu_custom_call.1} parent=11 // pred_region
          %533 = vsyncadd [#allocation8], 0
          %s535 = sshll.u32 %s4, 4
          %s536 = int_to_ptr.hbm [resolvable:$true] %s535
          %s537 = sshll.u32 [#allocation7], 4
          %s538 = int_to_ptr.vmem [resolvable:$true] %s537
          %540 = dma.hbm_to_vmem [thread:$0]  %s536, 64, %s538, [#allocation8]
        $region20: #{tpu_custom_call.1} parent=11 // pred_fallthru
          _
        // Predicated region
        $region21: #{tpu_custom_call.1} parent=11 // pred_check
          %p541 = pneg %p161
        $region22: #{tpu_custom_call.1} parent=11 // pred_check_branch
          %543 = sbr.rel (%p541) target = $region24
        $region23: #{tpu_custom_call.1} parent=11 // pred_region
          %545 = vsyncadd [#allocation8], 0
          %s546 = sshll.u32 %s5, 4
          %s547 = int_to_ptr.hbm [resolvable:$true] %s546
          %s548 = sshll.u32 [#allocation9], 4
          %s549 = int_to_ptr.vmem [resolvable:$true] %s548
          %554 = dma.hbm_to_vmem [thread:$0]  %s547, 256, %s549, [#allocation8], 64, 64, 4
        $region24: #{tpu_custom_call.1} parent=11 // pred_fallthru
          _
        // Predicated region
        $region25: #{tpu_custom_call.1} parent=11 // pred_check
          %p555 = pneg %p182
        $region26: #{tpu_custom_call.1} parent=11 // pred_check_branch
          %557 = sbr.rel (%p555) target = $region28
        $region27: #{tpu_custom_call.1} parent=11 // pred_region
          _
        $region28: #{tpu_custom_call.1} parent=11 // pred_fallthru
          _
        // Predicated region
        $region29: #{tpu_custom_call.1} parent=11 // pred_check
          %p558 = pneg %p203
        $region30: #{tpu_custom_call.1} parent=11 // pred_check_branch
          %560 = sbr.rel (%p558) target = $region32
        $region31: #{tpu_custom_call.1} parent=11 // pred_region
          %562 = vsyncadd [#allocation11], 0
          %s563 = sshll.u32 %s7, 4
          %s564 = int_to_ptr.hbm [resolvable:$true] %s563
          %s565 = sshll.u32 [#allocation10], 4
          %s566 = int_to_ptr.vmem [resolvable:$true] %s565
          %571 = dma.hbm_to_vmem [thread:$0]  %s564, 256, %s566, [#allocation11], 64, 64, 4
        $region32: #{tpu_custom_call.1} parent=11 // pred_fallthru
          _
        // Predicated region
        $region33: #{tpu_custom_call.1} parent=11 // pred_check
          %p572 = pneg %p224
        $region34: #{tpu_custom_call.1} parent=11 // pred_check_branch
          %574 = sbr.rel (%p572) target = $region36
        $region35: #{tpu_custom_call.1} parent=11 // pred_region
          %576 = vsyncadd [#allocation11], 0
          %s578 = sshll.u32 %s8, 4
          %s579 = int_to_ptr.hbm [resolvable:$true] %s578
          %s580 = sshll.u32 [#allocation12], 4
          %s581 = int_to_ptr.vmem [resolvable:$true] %s580
          %583 = dma.hbm_to_vmem [thread:$0]  %s579, 16, %s581, [#allocation11]
        $region36: #{tpu_custom_call.1} parent=11 // pred_fallthru
          _
        // Predicated region
        $region37: #{tpu_custom_call.1} parent=11 // pred_check
          %p584 = pneg %p245
        $region38: #{tpu_custom_call.1} parent=11 // pred_check_branch
          %586 = sbr.rel (%p584) target = $region40
        $region39: #{tpu_custom_call.1} parent=11 // pred_region
          %588 = vsyncadd [#allocation14], 0
          %s589 = sshll.u32 %s9, 4
          %s590 = int_to_ptr.hbm [resolvable:$true] %s589
          %s591 = sshll.u32 [#allocation13], 4
          %s592 = int_to_ptr.vmem [resolvable:$true] %s591
          %597 = dma.hbm_to_vmem [thread:$0]  %s590, 256, %s592, [#allocation14], 64, 64, 4
        $region40: #{tpu_custom_call.1} parent=11 // pred_fallthru
          _
        // Predicated region
        $region41: #{tpu_custom_call.1} parent=11 // pred_check
          %p598 = pneg %p266
        $region42: #{tpu_custom_call.1} parent=11 // pred_check_branch
          %600 = sbr.rel (%p598) target = $region44
        $region43: #{tpu_custom_call.1} parent=11 // pred_region
          %602 = vsyncadd [#allocation14], 0
          %s604 = sshll.u32 %s10, 4
          %s605 = int_to_ptr.hbm [resolvable:$true] %s604
          %s606 = sshll.u32 [#allocation15], 4
          %s607 = int_to_ptr.vmem [resolvable:$true] %s606
          %609 = dma.hbm_to_vmem [thread:$0]  %s605, 16, %s607, [#allocation14]
        $region44: #{tpu_custom_call.1} parent=11 // pred_fallthru
          _
        // Predicated region
        $region45: #{tpu_custom_call.1} parent=11 // pred_check
          %p610 = pneg %p287
        $region46: #{tpu_custom_call.1} parent=11 // pred_check_branch
          %612 = sbr.rel (%p610) target = $region48
        $region47: #{tpu_custom_call.1} parent=11 // pred_region
          %614 = vsyncadd [#allocation17], 0
          %s615 = sshll.u32 %s11, 4
          %s616 = int_to_ptr.hbm [resolvable:$true] %s615
          %s617 = sshll.u32 [#allocation16], 4
          %s618 = int_to_ptr.vmem [resolvable:$true] %s617
          %623 = dma.hbm_to_vmem [thread:$0]  %s616, 256, %s618, [#allocation17], 64, 64, 4
        $region48: #{tpu_custom_call.1} parent=11 // pred_fallthru
          _
        // Predicated region
        $region49: #{tpu_custom_call.1} parent=11 // pred_check
          %p624 = pneg %p308
        $region50: #{tpu_custom_call.1} parent=11 // pred_check_branch
          %626 = sbr.rel (%p624) target = $region52
        $region51: #{tpu_custom_call.1} parent=11 // pred_region
          %628 = vsyncadd [#allocation17], 0
          %s630 = sshll.u32 %s12, 4
          %s631 = int_to_ptr.hbm [resolvable:$true] %s630
          %s632 = sshll.u32 [#allocation18], 4
          %s633 = int_to_ptr.vmem [resolvable:$true] %s632
          %635 = dma.hbm_to_vmem [thread:$0]  %s631, 16, %s633, [#allocation17]
        $region52: #{tpu_custom_call.1} parent=11 // pred_fallthru
          _
        // Predicated region
        $region53: #{tpu_custom_call.1} parent=11 // pred_check
          %p636 = pneg %p329
        $region54: #{tpu_custom_call.1} parent=11 // pred_check_branch
          %638 = sbr.rel (%p636) target = $region56
        $region55: #{tpu_custom_call.1} parent=11 // pred_region
          %640 = vsyncadd [#allocation20], 0
          %s641 = sshll.u32 %s13, 4
          %s642 = int_to_ptr.hbm [resolvable:$true] %s641
          %s643 = sshll.u32 [#allocation19], 4
          %s644 = int_to_ptr.vmem [resolvable:$true] %s643
          %649 = dma.hbm_to_vmem [thread:$0]  %s642, 256, %s644, [#allocation20], 64, 64, 4
        $region56: #{tpu_custom_call.1} parent=11 // pred_fallthru
          _
        // Predicated region
        $region57: #{tpu_custom_call.1} parent=11 // pred_check
          %p650 = pneg %p350
        $region58: #{tpu_custom_call.1} parent=11 // pred_check_branch
          %652 = sbr.rel (%p650) target = $region60
        $region59: #{tpu_custom_call.1} parent=11 // pred_region
          %654 = vsyncadd [#allocation20], 0
          %s656 = sshll.u32 %s14, 4
          %s657 = int_to_ptr.hbm [resolvable:$true] %s656
          %s658 = sshll.u32 [#allocation21], 4
          %s659 = int_to_ptr.vmem [resolvable:$true] %s658
          %661 = dma.hbm_to_vmem [thread:$0]  %s657, 16, %s659, [#allocation20]
        $region60: #{tpu_custom_call.1} parent=11 // pred_fallthru
          _
        // Predicated region
        $region61: #{tpu_custom_call.1} parent=11 // pred_check
          %p662 = pneg %p371
        $region62: #{tpu_custom_call.1} parent=11 // pred_check_branch
          %664 = sbr.rel (%p662) target = $region64
        $region63: #{tpu_custom_call.1} parent=11 // pred_region
          %666 = vsyncadd [#allocation23], 0
          %s667 = sshll.u32 %s15, 4
          %s668 = int_to_ptr.hbm [resolvable:$true] %s667
          %s669 = sshll.u32 [#allocation22], 4
          %s670 = int_to_ptr.vmem [resolvable:$true] %s669
          %675 = dma.hbm_to_vmem [thread:$0]  %s668, 256, %s670, [#allocation23], 64, 64, 4
        $region64: #{tpu_custom_call.1} parent=11 // pred_fallthru
          _
        // Predicated region
        $region65: #{tpu_custom_call.1} parent=11 // pred_check
          %p676 = pneg %p392
        $region66: #{tpu_custom_call.1} parent=11 // pred_check_branch
          %678 = sbr.rel (%p676) target = $region68
        $region67: #{tpu_custom_call.1} parent=11 // pred_region
          %680 = vsyncadd [#allocation23], 0
          %s682 = sshll.u32 %s16, 4
          %s683 = int_to_ptr.hbm [resolvable:$true] %s682
          %s684 = sshll.u32 [#allocation24], 4
          %s685 = int_to_ptr.vmem [resolvable:$true] %s684
          %687 = dma.hbm_to_vmem [thread:$0]  %s683, 16, %s685, [#allocation23]
        $region68: #{tpu_custom_call.1} parent=11 // pred_fallthru
          _
        // Predicated region
        $region69: #{tpu_custom_call.1} parent=11 // pred_check
          %p688 = pneg %p413
        $region70: #{tpu_custom_call.1} parent=11 // pred_check_branch
          %690 = sbr.rel (%p688) target = $region72
        $region71: #{tpu_custom_call.1} parent=11 // pred_region
          %692 = vsyncadd [#allocation26], 0
          %s693 = sshll.u32 %s17, 4
          %s694 = int_to_ptr.hbm [resolvable:$true] %s693
          %s695 = sshll.u32 [#allocation25], 4
          %s696 = int_to_ptr.vmem [resolvable:$true] %s695
          %701 = dma.hbm_to_vmem [thread:$0]  %s694, 256, %s696, [#allocation26], 64, 64, 4
        $region72: #{tpu_custom_call.1} parent=11 // pred_fallthru
          _
        // Predicated region
        $region73: #{tpu_custom_call.1} parent=11 // pred_check
          %p702 = pneg %p434
        $region74: #{tpu_custom_call.1} parent=11 // pred_check_branch
          %704 = sbr.rel (%p702) target = $region76
        $region75: #{tpu_custom_call.1} parent=11 // pred_region
          %706 = vsyncadd [#allocation26], 0
          %s708 = sshll.u32 %s18, 4
          %s709 = int_to_ptr.hbm [resolvable:$true] %s708
          %s710 = sshll.u32 [#allocation27], 4
          %s711 = int_to_ptr.vmem [resolvable:$true] %s710
          %713 = dma.hbm_to_vmem [thread:$0]  %s709, 16, %s711, [#allocation26]
        $region76: #{tpu_custom_call.1} parent=11 // pred_fallthru
          _
        // Predicated region
        $region77: #{tpu_custom_call.1} parent=11 // pred_check
          %p714 = pneg %p455
        $region78: #{tpu_custom_call.1} parent=11 // pred_check_branch
          %716 = sbr.rel (%p714) target = $region80
        $region79: #{tpu_custom_call.1} parent=11 // pred_region
          _
        $region80: #{tpu_custom_call.1} parent=11 // pred_fallthru
          _
        // Predicated region
        $region81: #{tpu_custom_call.1} parent=11 // pred_check
          %p717 = pneg %p476
        $region82: #{tpu_custom_call.1} parent=11 // pred_check_branch
          %719 = sbr.rel (%p717) target = $region84
        $region83: #{tpu_custom_call.1} parent=11 // pred_region
          _
        $region84: #{tpu_custom_call.1} parent=11 // pred_fallthru
          _
      $region12: #{tpu_custom_call.1} parent=5 // pred_fallthru
        _
      %p720 = scmp.lt.s32.totalorder %s46, 2
      // Predicated region
      $region85: #{tpu_custom_call.1} parent=5 // pred_check
        %p721 = pneg %p720
      $region86: #{tpu_custom_call.1} parent=5 // pred_check_branch
        %723 = sbr.rel (%p721) target = $region88
      $region87: #{tpu_custom_call.1} parent=5 // pred_region
        // Predicated region
        $region89: #{tpu_custom_call.1} parent=87 // pred_check
          %p724 = pneg %p66
        $region90: #{tpu_custom_call.1} parent=87 // pred_check_branch
          %726 = sbr.rel (%p724) target = $region92
        $region91: #{tpu_custom_call.1} parent=87 // pred_region
          %p727 = scmp.lt.s32.totalorder %s46, 1
          %s728 = scalar_select %p727, %s46, 1
          %s729 = smul.addr %s728, 8
          %s730 = scalar_lea.vmem %s1, %s729
        $region92: #{tpu_custom_call.1} parent=87 // pred_fallthru
          _
        // Predicated region
        $region93: #{tpu_custom_call.1} parent=87 // pred_check
          %p731 = pneg %p92
        $region94: #{tpu_custom_call.1} parent=87 // pred_check_branch
          %733 = sbr.rel (%p731) target = $region96
        $region95: #{tpu_custom_call.1} parent=87 // pred_region
          %p734 = scmp.lt.s32.totalorder %s46, 1
          %s735 = scalar_select %p734, %s46, 1
          %s736 = smul.addr %s735, 2
          %s737 = smul.addr %s736, 8
          %s738 = scalar_lea.vmem %s2, %s737
        $region96: #{tpu_custom_call.1} parent=87 // pred_fallthru
          _
      $region88: #{tpu_custom_call.1} parent=5 // pred_fallthru
        _
      %p739 = scmp.le.s32.totalorder 1, %s46
      %p740 = scmp.lt.s32.totalorder %s46, 3
      %p741 = pnand %p739, %p740
      %p742 = pneg %p741
      // Predicated region
      $region97: #{tpu_custom_call.1} parent=5 // pred_check
        _
      $region98: #{tpu_custom_call.1} parent=5 // pred_check_branch
        %744 = sbr.rel (%p741) target = $region100
      $region99: #{tpu_custom_call.1} parent=5 // pred_region
        %s745 = ssub.s32 %s46, 1
        // Predicated region
        $region101: #{tpu_custom_call.1} parent=99 // pred_check
          %p746 = pneg %p119
        $region102: #{tpu_custom_call.1} parent=99 // pred_check_branch
          %748 = sbr.rel (%p746) target = $region104
        $region103: #{tpu_custom_call.1} parent=99 // pred_region
          %750 = dma.done [#allocation5], 64
        $region104: #{tpu_custom_call.1} parent=99 // pred_fallthru
          _
        // Predicated region
        $region105: #{tpu_custom_call.1} parent=99 // pred_check
          %p751 = pneg %p140
        $region106: #{tpu_custom_call.1} parent=99 // pred_check_branch
          %753 = sbr.rel (%p751) target = $region108
        $region107: #{tpu_custom_call.1} parent=99 // pred_region
          %755 = dma.done [#allocation8], 64
        $region108: #{tpu_custom_call.1} parent=99 // pred_fallthru
          _
        // Predicated region
        $region109: #{tpu_custom_call.1} parent=99 // pred_check
          %p756 = pneg %p161
        $region110: #{tpu_custom_call.1} parent=99 // pred_check_branch
          %758 = sbr.rel (%p756) target = $region112
        $region111: #{tpu_custom_call.1} parent=99 // pred_region
          %760 = dma.done [#allocation8], 256
        $region112: #{tpu_custom_call.1} parent=99 // pred_fallthru
          _
        // Predicated region
        $region113: #{tpu_custom_call.1} parent=99 // pred_check
          %p761 = pneg %p203
        $region114: #{tpu_custom_call.1} parent=99 // pred_check_branch
          %763 = sbr.rel (%p761) target = $region116
        $region115: #{tpu_custom_call.1} parent=99 // pred_region
          %765 = dma.done [#allocation11], 256
        $region116: #{tpu_custom_call.1} parent=99 // pred_fallthru
          _
        // Predicated region
        $region117: #{tpu_custom_call.1} parent=99 // pred_check
          %p766 = pneg %p224
        $region118: #{tpu_custom_call.1} parent=99 // pred_check_branch
          %768 = sbr.rel (%p766) target = $region120
        $region119: #{tpu_custom_call.1} parent=99 // pred_region
          %770 = dma.done [#allocation11], 16
        $region120: #{tpu_custom_call.1} parent=99 // pred_fallthru
          _
        // Predicated region
        $region121: #{tpu_custom_call.1} parent=99 // pred_check
          %p771 = pneg %p245
        $region122: #{tpu_custom_call.1} parent=99 // pred_check_branch
          %773 = sbr.rel (%p771) target = $region124
        $region123: #{tpu_custom_call.1} parent=99 // pred_region
          %775 = dma.done [#allocation14], 256
        $region124: #{tpu_custom_call.1} parent=99 // pred_fallthru
          _
        // Predicated region
        $region125: #{tpu_custom_call.1} parent=99 // pred_check
          %p776 = pneg %p266
        $region126: #{tpu_custom_call.1} parent=99 // pred_check_branch
          %778 = sbr.rel (%p776) target = $region128
        $region127: #{tpu_custom_call.1} parent=99 // pred_region
          %780 = dma.done [#allocation14], 16
        $region128: #{tpu_custom_call.1} parent=99 // pred_fallthru
          _
        // Predicated region
        $region129: #{tpu_custom_call.1} parent=99 // pred_check
          %p781 = pneg %p287
        $region130: #{tpu_custom_call.1} parent=99 // pred_check_branch
          %783 = sbr.rel (%p781) target = $region132
        $region131: #{tpu_custom_call.1} parent=99 // pred_region
          %785 = dma.done [#allocation17], 256
        $region132: #{tpu_custom_call.1} parent=99 // pred_fallthru
          _
        // Predicated region
        $region133: #{tpu_custom_call.1} parent=99 // pred_check
          %p786 = pneg %p308
        $region134: #{tpu_custom_call.1} parent=99 // pred_check_branch
          %788 = sbr.rel (%p786) target = $region136
        $region135: #{tpu_custom_call.1} parent=99 // pred_region
          %790 = dma.done [#allocation17], 16
        $region136: #{tpu_custom_call.1} parent=99 // pred_fallthru
          _
        // Predicated region
        $region137: #{tpu_custom_call.1} parent=99 // pred_check
          %p791 = pneg %p329
        $region138: #{tpu_custom_call.1} parent=99 // pred_check_branch
          %793 = sbr.rel (%p791) target = $region140
        $region139: #{tpu_custom_call.1} parent=99 // pred_region
          %795 = dma.done [#allocation20], 256
        $region140: #{tpu_custom_call.1} parent=99 // pred_fallthru
          _
        // Predicated region
        $region141: #{tpu_custom_call.1} parent=99 // pred_check
          %p796 = pneg %p350
        $region142: #{tpu_custom_call.1} parent=99 // pred_check_branch
          %798 = sbr.rel (%p796) target = $region144
        $region143: #{tpu_custom_call.1} parent=99 // pred_region
          %800 = dma.done [#allocation20], 16
        $region144: #{tpu_custom_call.1} parent=99 // pred_fallthru
          _
        // Predicated region
        $region145: #{tpu_custom_call.1} parent=99 // pred_check
          %p801 = pneg %p371
        $region146: #{tpu_custom_call.1} parent=99 // pred_check_branch
          %803 = sbr.rel (%p801) target = $region148
        $region147: #{tpu_custom_call.1} parent=99 // pred_region
          %805 = dma.done [#allocation23], 256
        $region148: #{tpu_custom_call.1} parent=99 // pred_fallthru
          _
        // Predicated region
        $region149: #{tpu_custom_call.1} parent=99 // pred_check
          %p806 = pneg %p392
        $region150: #{tpu_custom_call.1} parent=99 // pred_check_branch
          %808 = sbr.rel (%p806) target = $region152
        $region151: #{tpu_custom_call.1} parent=99 // pred_region
          %810 = dma.done [#allocation23], 16
        $region152: #{tpu_custom_call.1} parent=99 // pred_fallthru
          _
        // Predicated region
        $region153: #{tpu_custom_call.1} parent=99 // pred_check
          %p811 = pneg %p413
        $region154: #{tpu_custom_call.1} parent=99 // pred_check_branch
          %813 = sbr.rel (%p811) target = $region156
        $region155: #{tpu_custom_call.1} parent=99 // pred_region
          %815 = dma.done [#allocation26], 256
        $region156: #{tpu_custom_call.1} parent=99 // pred_fallthru
          _
        // Predicated region
        $region157: #{tpu_custom_call.1} parent=99 // pred_check
          %p816 = pneg %p434
        $region158: #{tpu_custom_call.1} parent=99 // pred_check_branch
          %818 = sbr.rel (%p816) target = $region160
        $region159: #{tpu_custom_call.1} parent=99 // pred_region
          %820 = dma.done [#allocation26], 16
        $region160: #{tpu_custom_call.1} parent=99 // pred_fallthru
          _
        %p821 = scmp.lt.s32.totalorder %s51, 1
        %s822 = scalar_select %p821, %s51, 1
        %s823 = smul.addr %s822, 8
        %s824 = scalar_lea.vmem %s1, %s823
        %p825 = pneg %p72
        %p826 = pneg %p69
        %p827 = scmp.lt.s32.totalorder %s51, 1
        %s828 = scalar_select %p827, %s51, 1
        %s829 = smul.addr %s828, 2
        %s830 = smul.addr %s829, 8
        %s831 = scalar_lea.vmem %s2, %s830
        %p832 = pneg %p98
        %p833 = pneg %p95
        %p834 = pneg %p119
        %p835 = pneg %p116
        %p836 = pneg %p140
        %p837 = pneg %p137
        %p838 = pneg %p161
        %p839 = pneg %p158
        %p840 = pneg %p182
        %p841 = pneg %p179
        %p842 = pneg %p203
        %p843 = pneg %p200
        %p844 = pneg %p224
        %p845 = pneg %p221
        %p846 = pneg %p245
        %p847 = pneg %p242
        %p848 = pneg %p266
        %p849 = pneg %p263
        %p850 = pneg %p287
        %p851 = pneg %p284
        %p852 = pneg %p308
        %p853 = pneg %p305
        %p854 = pneg %p329
        %p855 = pneg %p326
        %p856 = pneg %p350
        %p857 = pneg %p347
        %p858 = pneg %p371
        %p859 = pneg %p368
        %p860 = pneg %p392
        %p861 = pneg %p389
        %p862 = pneg %p413
        %p863 = pneg %p410
        %p864 = pneg %p434
        %p865 = pneg %p431
        %p866 = pneg %p455
        %p867 = pneg %p452
        %p868 = pneg %p476
        %p869 = pneg %p473
        %p870 = pneg %p502
        %p871 = pneg %p499
        %s872 = sand.u32 %s489, 1
        %s873 = scalar_lea.sflag [#allocation6], %s872
        %s874 = sand.u32 %s489, 1
        %s875 = smul.addr %s874, 8
        %s876 = scalar_lea.vmem [#allocation28], %s875
        %p877 = scmp.lt.s32.totalorder %s51, 1
        %s878 = scalar_select %p877, %s51, 1
        %s879 = smul.addr %s878, 8
        %s880 = scalar_lea.vmem %s1, %s879
        %p881 = scmp.lt.s32.totalorder %s51, 1
        %s882 = scalar_select %p881, %s51, 1
        %s883 = smul.addr %s882, 2
        %s884 = smul.addr %s883, 8
        %s885 = scalar_lea.vmem %s2, %s884
        %v887 = vld [vmem:[%s880] sm:$0xff]
        %v888 = vld [vmem:[%s885] sm:$0xff]
        %v889 = vld [vmem:[%s885 + $0x8] sm:$0xff]
        %v890 = vld [vmem:[#allocation4] sm:$0x7]
        %v891 = vld [vmem:[#allocation7] sm:$0x7]
        %v892 = vlaneseq
        %v893 = vshrl.u32 %v892, 7
        %v894 = vlaneseq
        %v895 = vand.u32 %v894, 127
        %vm896 = vcmp.ge.s32.totalorder %v893, %v895
        %v897 = vsel %vm896, 0.0, -1e+09
        %s898 = sld [smem:[#allocation3 + %s51]]
        %v899 = vstv %s898
        %vm900 = vcmp.lt.s32.totalorder %v895, %v899
        %v901 = vsel %vm900, 0.0, -1e+09
        %vm902 = vcmask 261120
        %v903 = vsel %vm902, %v887, 0.0
        %904 = vadd.xlane.f32.xlu0 %v903
        %v905 = vpop.xlane.xlu0 %904
        %v906 = vrcp.pop 32.0
        %v907 = vmul.f32 32.0, %v906
        %v908 = vsub.f32 1.0, %v907
        %v909 = vmul.f32 %v906, %v908
        %v910 = vadd.f32 %v906, %v909
        %vm911 = vweird.f32 %v906
        %v912 = vsel %vm911, %v906, %v910
        %v913 = vmul.f32 %v905, %v912
        %v914 = vsub.f32 %v887, %v913
        %v915 = vmul.f32 %v914, %v914
        %v916 = vsel %vm902, %v915, 0.0
        %917 = vadd.xlane.f32.xlu0 %v916
        %v918 = vpop.xlane.xlu0 %917
        %v919 = vmul.f32 %v918, %v912
        %v920 = vadd.f32 %v919, 1e-06
        %v921 = vrsqrt.pop %v920
        %v922 = vmul.f32 %v921, %v920
        %v923 = vmul.f32 %v922, %v921
        %v924 = vmul.f32 0.5, %v923
        %v925 = vsub.f32 1.5, %v924
        %v926 = vmul.f32 %v921, %v925
        %vm927 = vweird.f32 %v920
        %vm928 = vweird.f32 %v921
        %vm929 = vmor %vm927, %vm928
        %v930 = vsel %vm929, %v921, %v926
        %v931 = vmul.f32 %v914, %v930
        %v932 = vperm.slane %v890, 0
        %v933 = vmul.f32 %v931, %v932
        %v934 = vperm.slane %v891, 0
        %v935 = vadd.f32 %v933, %v934
        %v936 = vld [vmem:[#allocation9] sm:$0xf]
        %v937 = vld [vmem:[#allocation9 + $0x4] sm:$0xf]
        %v938 = vld [vmem:[#allocation9 + $0x8] sm:$0xf]
        %v939 = vld [vmem:[#allocation9 + $0xc] sm:$0xf]
        %v940 = vld [vmem:[%s6] sm:$0x1]
        %v941 = vld [vmem:[#allocation10] sm:$0xf]
        %v942 = vld [vmem:[#allocation10 + $0x4] sm:$0xf]
        %v943 = vld [vmem:[#allocation10 + $0x8] sm:$0xf]
        %v944 = vld [vmem:[#allocation10 + $0xc] sm:$0xf]
        %v945 = vld [vmem:[#allocation12] sm:$0x1]
        %v946 = vld [vmem:[#allocation13] sm:$0xf]
        %v947 = vld [vmem:[#allocation13 + $0x4] sm:$0xf]
        %v948 = vld [vmem:[#allocation13 + $0x8] sm:$0xf]
        %v949 = vld [vmem:[#allocation13 + $0xc] sm:$0xf]
        %v950 = vld [vmem:[#allocation15] sm:$0x1]
        %v951 = vpack.c.bf16 %v935, %v935
        %v953 = vperm.slane %v940, 0
        %v959 = vunpack.c.l.b16 %v936
        %v960 = vunpack.c.l.b16 %v937
        %v961 = vunpack.c.l.b16 %v938
        %v962 = vunpack.c.l.b16 %v939
        %v963 = vpack.c.b16 %v960, %v959
        %v964 = vpack.c.b16 %v962, %v961
        %v968 = vsel %vm902, %v951, 0
        %970 = vmatpush.bf16.msra.mxu0 0
        %971 = vmatpush.bf16.msra.mxu0 0
        %972 = vmatpush.bf16.msra.mxu0 0
        %973 = vmatpush.bf16.msra.mxu0 0
        %974 = vmatpush.bf16.msra.mxu0 0
        %975 = vmatpush.bf16.msra.mxu0 0
        %976 = vmatpush.bf16.msra.mxu0 %v964
        %977 = vmatpush.bf16.msra.mxu0 %v963
        %978 = vmatmul.bf16.gmra.mxu0 %v968
        %v979 = vpop.f32.mrf.mxu0
        %v980 = vadd.f32 %v953, %v979
        %v981 = vpop.f32.mrf.mxu0
        %982 = vdwg.mxu0
        %v984 = vperm.slane %v945, 0
        %v990 = vunpack.c.l.b16 %v941
        %v991 = vunpack.c.l.b16 %v942
        %v992 = vunpack.c.l.b16 %v943
        %v993 = vunpack.c.l.b16 %v944
        %v994 = vpack.c.b16 %v991, %v990
        %v995 = vpack.c.b16 %v993, %v992
        %998 = vmatpush.bf16.msra.mxu0 0
        %999 = vmatpush.bf16.msra.mxu0 0
        %1000 = vmatpush.bf16.msra.mxu0 0
        %1001 = vmatpush.bf16.msra.mxu0 0
        %1002 = vmatpush.bf16.msra.mxu0 0
        %1003 = vmatpush.bf16.msra.mxu0 0
        %1004 = vmatpush.bf16.msra.mxu0 %v995
        %1005 = vmatpush.bf16.msra.mxu0 %v994
        %1006 = vmatmul.bf16.gmra.mxu0 %v968
        %v1007 = vpop.f32.mrf.mxu0
        %v1008 = vadd.f32 %v984, %v1007
        %v1009 = vpop.f32.mrf.mxu0
        %1010 = vdwg.mxu0
        %v1011 = vpack.c.bf16 %v980, %v980
        %v1012 = vpack.c.bf16 %v1008, %v1008
        %vm1013 = vcmask 64512
        %v1015 = vsel %vm1013, %v1011, 0
        %v1018 = vsel %vm1013, %v1012, 0
        %1020 = vmatpush.bf16.xpose.msra.mxu0 0
        %1021 = vmatpush.bf16.xpose.msra.mxu0 0
        %1022 = vmatpush.bf16.xpose.msra.mxu0 0
        %1023 = vmatpush.bf16.xpose.msra.mxu0 0
        %1024 = vmatpush.bf16.xpose.msra.mxu0 0
        %1025 = vmatpush.bf16.xpose.msra.mxu0 0
        %1026 = vmatpush.bf16.xpose.msra.mxu0 0
        %1027 = vmatpush.bf16.xpose.msra.mxu0 %v1018
        %1028 = vmatmul.bf16.gmra.mxu0 %v1015
        %v1029 = vpop.f32.mrf.mxu0
        %v1030 = vadd.f32 %v897, %v1029
        %v1031 = vpop.f32.mrf.mxu0
        %1032 = vdwg.mxu0
        %v1033 = vsel %vm1013, %v1030, -inf
        %1034 = vmax.xlane.f32.xlu0 %v1033
        %v1035 = vpop.xlane.xlu0 %1034
        %v1036 = vsub.f32 %v1030, %v1035
        %v1037 = vmul.f32 %v1036, 1.442695
        %v1038 = vpow.pop %v1037
        %v1039 = vsel %vm1013, %v1038, 0.0
        %1040 = vadd.xlane.f32.xlu0 %v1039
        %v1041 = vpop.xlane.xlu0 %1040
        %v1042 = vrcp.pop %v1041
        %v1043 = vmul.f32 %v1038, %v1042
        %v1044 = vpack.c.bf16 %v1043, %v1043
        %v1046 = vunpack.c.l.b16 %v1012
        %v1047 = vpack.c.b16 %v1046, %v1046
        %1048 = vrot.lane.b32.xlu0 %v1047, 96
        %v1049 = vpop.permute.xlu0 %1048
        %v1051 = vsel %vm1013, %v1044, 0
        %vm1053 = vcmask 1043456
        %v1055 = vsel %vm1053, %v1049, 0
        %1057 = vmatpush.bf16.msra.mxu0 0
        %1058 = vmatpush.bf16.msra.mxu0 0
        %1059 = vmatpush.bf16.msra.mxu0 0
        %1060 = vmatpush.bf16.msra.mxu0 0
        %1061 = vmatpush.bf16.msra.mxu0 0
        %1062 = vmatpush.bf16.msra.mxu0 0
        %1063 = vmatpush.bf16.msra.mxu0 0
        %1064 = vmatpush.bf16.msra.mxu0 %v1055
        %1065 = vmatmul.bf16.gmra.mxu0 %v1051
        %v1066 = vpop.f32.mrf.mxu0
        %v1067 = vadd.f32 0.0, %v1066
        %v1068 = vpop.f32.mrf.mxu0
        %1069 = vdwg.mxu0
        %v1071 = vunpack.c.l.b16 %v1011
        %v1072 = vpack.c.b16 %v1071, %v1071
        %1073 = vrot.lane.b32.xlu0 %v1072, 120
        %v1074 = vpop.permute.xlu0 %1073
        %1075 = vrot.lane.b32.xlu0 %v1047, 120
        %v1076 = vpop.permute.xlu0 %1075
        %v1078 = vsel %vm1013, %v1074, 0
        %v1081 = vsel %vm1013, %v1076, 0
        %1083 = vmatpush.bf16.xpose.msra.mxu0 0
        %1084 = vmatpush.bf16.xpose.msra.mxu0 0
        %1085 = vmatpush.bf16.xpose.msra.mxu0 0
        %1086 = vmatpush.bf16.xpose.msra.mxu0 0
        %1087 = vmatpush.bf16.xpose.msra.mxu0 0
        %1088 = vmatpush.bf16.xpose.msra.mxu0 0
        %1089 = vmatpush.bf16.xpose.msra.mxu0 0
        %1090 = vmatpush.bf16.xpose.msra.mxu0 %v1081
        %1091 = vmatmul.bf16.gmra.mxu0 %v1078
        %v1092 = vpop.f32.mrf.mxu0
        %v1093 = vadd.f32 %v897, %v1092
        %v1094 = vpop.f32.mrf.mxu0
        %1095 = vdwg.mxu0
        %v1096 = vsel %vm1013, %v1093, -inf
        %1097 = vmax.xlane.f32.xlu0 %v1096
        %v1098 = vpop.xlane.xlu0 %1097
        %v1099 = vsub.f32 %v1093, %v1098
        %v1100 = vmul.f32 %v1099, 1.442695
        %v1101 = vpow.pop %v1100
        %v1102 = vsel %vm1013, %v1101, 0.0
        %1103 = vadd.xlane.f32.xlu0 %v1102
        %v1104 = vpop.xlane.xlu0 %1103
        %v1105 = vrcp.pop %v1104
        %v1106 = vmul.f32 %v1101, %v1105
        %v1107 = vpack.c.bf16 %v1106, %v1106
        %1108 = vrot.lane.b32.xlu0 %v1047, 88
        %v1109 = vpop.permute.xlu0 %1108
        %v1111 = vsel %vm1013, %v1107, 0
        %v1114 = vsel %vm1053, %v1109, 0
        %1116 = vmatpush.bf16.msra.mxu0 0
        %1117 = vmatpush.bf16.msra.mxu0 0
        %1118 = vmatpush.bf16.msra.mxu0 0
        %1119 = vmatpush.bf16.msra.mxu0 0
        %1120 = vmatpush.bf16.msra.mxu0 0
        %1121 = vmatpush.bf16.msra.mxu0 0
        %1122 = vmatpush.bf16.msra.mxu0 0
        %1123 = vmatpush.bf16.msra.mxu0 %v1114
        %1124 = vmatmul.bf16.gmra.mxu0 %v1111
        %v1125 = vpop.f32.mrf.mxu0
        %v1126 = vadd.f32 0.0, %v1125
        %v1127 = vpop.f32.mrf.mxu0
        %1128 = vdwg.mxu0
        %1129 = vrot.lane.b32.xlu0 %v1072, 112
        %v1130 = vpop.permute.xlu0 %1129
        %1131 = vrot.lane.b32.xlu0 %v1047, 112
        %v1132 = vpop.permute.xlu0 %1131
        %v1134 = vsel %vm1013, %v1130, 0
        %v1137 = vsel %vm1013, %v1132, 0
        %1139 = vmatpush.bf16.xpose.msra.mxu0 0
        %1140 = vmatpush.bf16.xpose.msra.mxu0 0
        %1141 = vmatpush.bf16.xpose.msra.mxu0 0
        %1142 = vmatpush.bf16.xpose.msra.mxu0 0
        %1143 = vmatpush.bf16.xpose.msra.mxu0 0
        %1144 = vmatpush.bf16.xpose.msra.mxu0 0
        %1145 = vmatpush.bf16.xpose.msra.mxu0 0
        %1146 = vmatpush.bf16.xpose.msra.mxu0 %v1137
        %1147 = vmatmul.bf16.gmra.mxu0 %v1134
        %v1148 = vpop.f32.mrf.mxu0
        %v1149 = vadd.f32 %v897, %v1148
        %v1150 = vpop.f32.mrf.mxu0
        %1151 = vdwg.mxu0
        %v1152 = vsel %vm1013, %v1149, -inf
        %1153 = vmax.xlane.f32.xlu0 %v1152
        %v1154 = vpop.xlane.xlu0 %1153
        %v1155 = vsub.f32 %v1149, %v1154
        %v1156 = vmul.f32 %v1155, 1.442695
        %v1157 = vpow.pop %v1156
        %v1158 = vsel %vm1013, %v1157, 0.0
        %1159 = vadd.xlane.f32.xlu0 %v1158
        %v1160 = vpop.xlane.xlu0 %1159
        %v1161 = vrcp.pop %v1160
        %v1162 = vmul.f32 %v1157, %v1161
        %v1163 = vpack.c.bf16 %v1162, %v1162
        %1164 = vrot.lane.b32.xlu0 %v1047, 80
        %v1165 = vpop.permute.xlu0 %1164
        %v1167 = vsel %vm1013, %v1163, 0
        %v1170 = vsel %vm1053, %v1165, 0
        %1172 = vmatpush.bf16.msra.mxu0 0
        %1173 = vmatpush.bf16.msra.mxu0 0
        %1174 = vmatpush.bf16.msra.mxu0 0
        %1175 = vmatpush.bf16.msra.mxu0 0
        %1176 = vmatpush.bf16.msra.mxu0 0
        %1177 = vmatpush.bf16.msra.mxu0 0
        %1178 = vmatpush.bf16.msra.mxu0 0
        %1179 = vmatpush.bf16.msra.mxu0 %v1170
        %1180 = vmatmul.bf16.gmra.mxu0 %v1167
        %v1181 = vpop.f32.mrf.mxu0
        %v1182 = vadd.f32 0.0, %v1181
        %v1183 = vpop.f32.mrf.mxu0
        %1184 = vdwg.mxu0
        %1185 = vrot.lane.b32.xlu0 %v1072, 104
        %v1186 = vpop.permute.xlu0 %1185
        %1187 = vrot.lane.b32.xlu0 %v1047, 104
        %v1188 = vpop.permute.xlu0 %1187
        %v1190 = vsel %vm1013, %v1186, 0
        %v1193 = vsel %vm1013, %v1188, 0
        %1195 = vmatpush.bf16.xpose.msra.mxu0 0
        %1196 = vmatpush.bf16.xpose.msra.mxu0 0
        %1197 = vmatpush.bf16.xpose.msra.mxu0 0
        %1198 = vmatpush.bf16.xpose.msra.mxu0 0
        %1199 = vmatpush.bf16.xpose.msra.mxu0 0
        %1200 = vmatpush.bf16.xpose.msra.mxu0 0
        %1201 = vmatpush.bf16.xpose.msra.mxu0 0
        %1202 = vmatpush.bf16.xpose.msra.mxu0 %v1193
        %1203 = vmatmul.bf16.gmra.mxu0 %v1190
        %v1204 = vpop.f32.mrf.mxu0
        %v1205 = vadd.f32 %v897, %v1204
        %v1206 = vpop.f32.mrf.mxu0
        %1207 = vdwg.mxu0
        %v1208 = vsel %vm1013, %v1205, -inf
        %1209 = vmax.xlane.f32.xlu0 %v1208
        %v1210 = vpop.xlane.xlu0 %1209
        %v1211 = vsub.f32 %v1205, %v1210
        %v1212 = vmul.f32 %v1211, 1.442695
        %v1213 = vpow.pop %v1212
        %v1214 = vsel %vm1013, %v1213, 0.0
        %1215 = vadd.xlane.f32.xlu0 %v1214
        %v1216 = vpop.xlane.xlu0 %1215
        %v1217 = vrcp.pop %v1216
        %v1218 = vmul.f32 %v1213, %v1217
        %v1219 = vpack.c.bf16 %v1218, %v1218
        %1220 = vrot.lane.b32.xlu0 %v1047, 72
        %v1221 = vpop.permute.xlu0 %1220
        %v1223 = vsel %vm1013, %v1219, 0
        %v1226 = vsel %vm1053, %v1221, 0
        %1228 = vmatpush.bf16.msra.mxu0 0
        %1229 = vmatpush.bf16.msra.mxu0 0
        %1230 = vmatpush.bf16.msra.mxu0 0
        %1231 = vmatpush.bf16.msra.mxu0 0
        %1232 = vmatpush.bf16.msra.mxu0 0
        %1233 = vmatpush.bf16.msra.mxu0 0
        %1234 = vmatpush.bf16.msra.mxu0 0
        %1235 = vmatpush.bf16.msra.mxu0 %v1226
        %1236 = vmatmul.bf16.gmra.mxu0 %v1223
        %v1237 = vpop.f32.mrf.mxu0
        %v1238 = vadd.f32 0.0, %v1237
        %v1239 = vpop.f32.mrf.mxu0
        %1240 = vdwg.mxu0
        %1242 = vrot.lane.b32.xlu0 %v1126, 8
        %v1243 = vpop.permute.xlu0 %1242
        %1246 = vrot.lane.b32.xlu0 %v1182, 16
        %v1247 = vpop.permute.xlu0 %1246
        %1250 = vrot.lane.b32.xlu0 %v1238, 24
        %v1251 = vpop.permute.xlu0 %1250
        %v1253 = vsel %vm1013, %v1067, %v1243
        %vm1254 = vcmask 130048
        %v1255 = vsel %vm1254, %v1253, %v1247
        %vm1256 = vcmask 195584
        %v1257 = vsel %vm1256, %v1255, %v1251
        %v1258 = vpack.c.bf16 %v1257, %v1257
        %v1260 = vperm.slane %v950, 0
        %v1266 = vunpack.c.l.b16 %v946
        %v1267 = vunpack.c.l.b16 %v947
        %v1268 = vunpack.c.l.b16 %v948
        %v1269 = vunpack.c.l.b16 %v949
        %v1270 = vpack.c.b16 %v1267, %v1266
        %v1271 = vpack.c.b16 %v1269, %v1268
        %v1275 = vsel %vm902, %v1258, 0
        %1277 = vmatpush.bf16.msra.mxu0 0
        %1278 = vmatpush.bf16.msra.mxu0 0
        %1279 = vmatpush.bf16.msra.mxu0 0
        %1280 = vmatpush.bf16.msra.mxu0 0
        %1281 = vmatpush.bf16.msra.mxu0 0
        %1282 = vmatpush.bf16.msra.mxu0 0
        %1283 = vmatpush.bf16.msra.mxu0 %v1271
        %1284 = vmatpush.bf16.msra.mxu0 %v1270
        %1285 = vmatmul.bf16.gmra.mxu0 %v1275
        %v1286 = vpop.f32.mrf.mxu0
        %v1287 = vadd.f32 %v1260, %v1286
        %v1288 = vpop.f32.mrf.mxu0
        %1289 = vdwg.mxu0
        %v1290 = vadd.f32 %v1287, %v887
        %v1291 = vsel %vm902, %v1290, 0.0
        %1292 = vadd.xlane.f32.xlu0 %v1291
        %v1293 = vpop.xlane.xlu0 %1292
        %v1294 = vmul.f32 %v1293, %v912
        %v1295 = vsub.f32 %v1290, %v1294
        %v1296 = vmul.f32 %v1295, %v1295
        %v1297 = vsel %vm902, %v1296, 0.0
        %1298 = vadd.xlane.f32.xlu0 %v1297
        %v1299 = vpop.xlane.xlu0 %1298
        %v1300 = vmul.f32 %v1299, %v912
        %v1301 = vadd.f32 %v1300, 1e-06
        %v1302 = vrsqrt.pop %v1301
        %v1303 = vmul.f32 %v1302, %v1301
        %v1304 = vmul.f32 %v1303, %v1302
        %v1305 = vmul.f32 0.5, %v1304
        %v1306 = vsub.f32 1.5, %v1305
        %v1307 = vmul.f32 %v1302, %v1306
        %vm1308 = vweird.f32 %v1301
        %vm1309 = vweird.f32 %v1302
        %vm1310 = vmor %vm1308, %vm1309
        %v1311 = vsel %vm1310, %v1302, %v1307
        %v1312 = vmul.f32 %v1295, %v1311
        %v1313 = vperm.slane %v890, 1
        %v1314 = vmul.f32 %v1312, %v1313
        %v1315 = vperm.slane %v891, 1
        %v1316 = vadd.f32 %v1314, %v1315
        %v1317 = vld [vmem:[#allocation16] sm:$0xf]
        %v1318 = vld [vmem:[#allocation16 + $0x4] sm:$0xf]
        %v1319 = vld [vmem:[#allocation16 + $0x8] sm:$0xf]
        %v1320 = vld [vmem:[#allocation16 + $0xc] sm:$0xf]
        %v1321 = vld [vmem:[#allocation18] sm:$0x1]
        %v1322 = vld [vmem:[#allocation19] sm:$0xf]
        %v1323 = vld [vmem:[#allocation19 + $0x4] sm:$0xf]
        %v1324 = vld [vmem:[#allocation19 + $0x8] sm:$0xf]
        %v1325 = vld [vmem:[#allocation19 + $0xc] sm:$0xf]
        %v1326 = vld [vmem:[#allocation21] sm:$0x1]
        %v1327 = vld [vmem:[#allocation22] sm:$0xf]
        %v1328 = vld [vmem:[#allocation22 + $0x4] sm:$0xf]
        %v1329 = vld [vmem:[#allocation22 + $0x8] sm:$0xf]
        %v1330 = vld [vmem:[#allocation22 + $0xc] sm:$0xf]
        %v1331 = vld [vmem:[#allocation24] sm:$0x1]
        %v1332 = vpack.c.bf16 %v1316, %v1316
        %v1334 = vperm.slane %v1321, 0
        %v1340 = vunpack.c.l.b16 %v1317
        %v1341 = vunpack.c.l.b16 %v1318
        %v1342 = vunpack.c.l.b16 %v1319
        %v1343 = vunpack.c.l.b16 %v1320
        %v1344 = vpack.c.b16 %v1341, %v1340
        %v1345 = vpack.c.b16 %v1343, %v1342
        %v1349 = vsel %vm902, %v1332, 0
        %1351 = vmatpush.bf16.msra.mxu0 0
        %1352 = vmatpush.bf16.msra.mxu0 0
        %1353 = vmatpush.bf16.msra.mxu0 0
        %1354 = vmatpush.bf16.msra.mxu0 0
        %1355 = vmatpush.bf16.msra.mxu0 0
        %1356 = vmatpush.bf16.msra.mxu0 0
        %1357 = vmatpush.bf16.msra.mxu0 %v1345
        %1358 = vmatpush.bf16.msra.mxu0 %v1344
        %1359 = vmatmul.bf16.gmra.mxu0 %v1349
        %v1360 = vpop.f32.mrf.mxu0
        %v1361 = vadd.f32 %v1334, %v1360
        %v1362 = vpop.f32.mrf.mxu0
        %1363 = vdwg.mxu0
        %v1364 = vpack.c.bf16 %v889, %v888
        %v1366 = vperm.slane %v1326, 0
        %v1372 = vunpack.c.l.b16 %v1322
        %v1373 = vunpack.c.l.b16 %v1323
        %v1374 = vunpack.c.l.b16 %v1324
        %v1375 = vunpack.c.l.b16 %v1325
        %v1376 = vpack.c.b16 %v1373, %v1372
        %v1377 = vpack.c.b16 %v1375, %v1374
        %v1381 = vsel %vm902, %v1364, 0
        %1383 = vmatpush.bf16.msra.mxu0 0
        %1384 = vmatpush.bf16.msra.mxu0 0
        %1385 = vmatpush.bf16.msra.mxu0 0
        %1386 = vmatpush.bf16.msra.mxu0 0
        %1387 = vmatpush.bf16.msra.mxu0 0
        %1388 = vmatpush.bf16.msra.mxu0 0
        %1389 = vmatpush.bf16.msra.mxu0 %v1377
        %1390 = vmatpush.bf16.msra.mxu0 %v1376
        %1391 = vmatmul.bf16.gmra.mxu0 %v1381
        %v1392 = vpop.f32.mrf.mxu0
        %v1393 = vadd.f32 %v1366, %v1392
        %v1394 = vpop.f32.mrf.mxu0
        %v1395 = vadd.f32 %v1366, %v1394
        %1396 = vdwg.mxu0
        %v1397 = vpack.c.bf16 %v1361, %v1361
        %v1398 = vpack.c.bf16 %v1393, %v1393
        %v1399 = vpack.c.bf16 %v1395, %v1395
        %v1402 = vunpack.c.l.b16 %v1398
        %v1403 = vunpack.c.l.b16 %v1399
        %v1404 = vpack.c.b16 %v1403, %v1402
        %v1406 = vsel %vm1013, %v1397, 0
        %v1409 = vsel %vm1013, %v1404, 0
        %1411 = vmatpush.bf16.xpose.msra.mxu0 0
        %1412 = vmatpush.bf16.xpose.msra.mxu0 0
        %1413 = vmatpush.bf16.xpose.msra.mxu0 0
        %1414 = vmatpush.bf16.xpose.msra.mxu0 0
        %1415 = vmatpush.bf16.xpose.msra.mxu0 0
        %1416 = vmatpush.bf16.xpose.msra.mxu0 0
        %1417 = vmatpush.bf16.xpose.msra.mxu0 0
        %1418 = vmatpush.bf16.xpose.msra.mxu0 %v1409
        %1419 = vmatmul.bf16.gmra.mxu0 %v1406
        %v1420 = vpop.f32.mrf.mxu0
        %v1421 = vadd.f32 %v901, %v1420
        %v1422 = vpop.f32.mrf.mxu0
        %1423 = vdwg.mxu0
        %v1424 = vsel %vm1254, %v1421, -inf
        %1425 = vmax.xlane.f32.xlu0 %v1424
        %v1426 = vpop.xlane.xlu0 %1425
        %v1427 = vsub.f32 %v1421, %v1426
        %v1428 = vmul.f32 %v1427, 1.442695
        %v1429 = vpow.pop %v1428
        %v1430 = vsel %vm1254, %v1429, 0.0
        %1431 = vadd.xlane.f32.xlu0 %v1430
        %v1432 = vpop.xlane.xlu0 %1431
        %v1433 = vrcp.pop %v1432
        %v1434 = vmul.f32 %v1429, %v1433
        %v1435 = vpack.c.bf16 %v1434, %v1434
        %1436 = vrot.lane.b32.xlu0 %v1404, 96
        %v1437 = vpop.permute.xlu0 %1436
        %v1440 = vsel %vm1254, %v1435, 0
        %1442 = vmatpush.bf16.msra.mxu0 0
        %1443 = vmatpush.bf16.msra.mxu0 0
        %1444 = vmatpush.bf16.msra.mxu0 0
        %1445 = vmatpush.bf16.msra.mxu0 0
        %1446 = vmatpush.bf16.msra.mxu0 0
        %1447 = vmatpush.bf16.msra.mxu0 0
        %1448 = vmatpush.bf16.msra.mxu0 0
        %1449 = vmatpush.bf16.msra.mxu0 %v1437
        %1450 = vmatmul.bf16.gmra.mxu0 %v1440
        %v1451 = vpop.f32.mrf.mxu0
        %v1452 = vadd.f32 0.0, %v1451
        %v1453 = vpop.f32.mrf.mxu0
        %1454 = vdwg.mxu0
        %v1456 = vunpack.c.l.b16 %v1397
        %v1457 = vpack.c.b16 %v1456, %v1456
        %1458 = vrot.lane.b32.xlu0 %v1457, 120
        %v1459 = vpop.permute.xlu0 %1458
        %1460 = vrot.lane.b32.xlu0 %v1404, 120
        %v1461 = vpop.permute.xlu0 %1460
        %v1463 = vsel %vm1013, %v1459, 0
        %v1466 = vsel %vm1013, %v1461, 0
        %1468 = vmatpush.bf16.xpose.msra.mxu0 0
        %1469 = vmatpush.bf16.xpose.msra.mxu0 0
        %1470 = vmatpush.bf16.xpose.msra.mxu0 0
        %1471 = vmatpush.bf16.xpose.msra.mxu0 0
        %1472 = vmatpush.bf16.xpose.msra.mxu0 0
        %1473 = vmatpush.bf16.xpose.msra.mxu0 0
        %1474 = vmatpush.bf16.xpose.msra.mxu0 0
        %1475 = vmatpush.bf16.xpose.msra.mxu0 %v1466
        %1476 = vmatmul.bf16.gmra.mxu0 %v1463
        %v1477 = vpop.f32.mrf.mxu0
        %v1478 = vadd.f32 %v901, %v1477
        %v1479 = vpop.f32.mrf.mxu0
        %1480 = vdwg.mxu0
        %v1481 = vsel %vm1254, %v1478, -inf
        %1482 = vmax.xlane.f32.xlu0 %v1481
        %v1483 = vpop.xlane.xlu0 %1482
        %v1484 = vsub.f32 %v1478, %v1483
        %v1485 = vmul.f32 %v1484, 1.442695
        %v1486 = vpow.pop %v1485
        %v1487 = vsel %vm1254, %v1486, 0.0
        %1488 = vadd.xlane.f32.xlu0 %v1487
        %v1489 = vpop.xlane.xlu0 %1488
        %v1490 = vrcp.pop %v1489
        %v1491 = vmul.f32 %v1486, %v1490
        %v1492 = vpack.c.bf16 %v1491, %v1491
        %1493 = vrot.lane.b32.xlu0 %v1404, 88
        %v1494 = vpop.permute.xlu0 %1493
        %v1497 = vsel %vm1254, %v1492, 0
        %1499 = vmatpush.bf16.msra.mxu0 0
        %1500 = vmatpush.bf16.msra.mxu0 0
        %1501 = vmatpush.bf16.msra.mxu0 0
        %1502 = vmatpush.bf16.msra.mxu0 0
        %1503 = vmatpush.bf16.msra.mxu0 0
        %1504 = vmatpush.bf16.msra.mxu0 0
        %1505 = vmatpush.bf16.msra.mxu0 0
        %1506 = vmatpush.bf16.msra.mxu0 %v1494
        %1507 = vmatmul.bf16.gmra.mxu0 %v1497
        %v1508 = vpop.f32.mrf.mxu0
        %v1509 = vadd.f32 0.0, %v1508
        %v1510 = vpop.f32.mrf.mxu0
        %1511 = vdwg.mxu0
        %1512 = vrot.lane.b32.xlu0 %v1457, 112
        %v1513 = vpop.permute.xlu0 %1512
        %1514 = vrot.lane.b32.xlu0 %v1404, 112
        %v1515 = vpop.permute.xlu0 %1514
        %v1517 = vsel %vm1013, %v1513, 0
        %v1520 = vsel %vm1013, %v1515, 0
        %1522 = vmatpush.bf16.xpose.msra.mxu0 0
        %1523 = vmatpush.bf16.xpose.msra.mxu0 0
        %1524 = vmatpush.bf16.xpose.msra.mxu0 0
        %1525 = vmatpush.bf16.xpose.msra.mxu0 0
        %1526 = vmatpush.bf16.xpose.msra.mxu0 0
        %1527 = vmatpush.bf16.xpose.msra.mxu0 0
        %1528 = vmatpush.bf16.xpose.msra.mxu0 0
        %1529 = vmatpush.bf16.xpose.msra.mxu0 %v1520
        %1530 = vmatmul.bf16.gmra.mxu0 %v1517
        %v1531 = vpop.f32.mrf.mxu0
        %v1532 = vadd.f32 %v901, %v1531
        %v1533 = vpop.f32.mrf.mxu0
        %1534 = vdwg.mxu0
        %v1535 = vsel %vm1254, %v1532, -inf
        %1536 = vmax.xlane.f32.xlu0 %v1535
        %v1537 = vpop.xlane.xlu0 %1536
        %v1538 = vsub.f32 %v1532, %v1537
        %v1539 = vmul.f32 %v1538, 1.442695
        %v1540 = vpow.pop %v1539
        %v1541 = vsel %vm1254, %v1540, 0.0
        %1542 = vadd.xlane.f32.xlu0 %v1541
        %v1543 = vpop.xlane.xlu0 %1542
        %v1544 = vrcp.pop %v1543
        %v1545 = vmul.f32 %v1540, %v1544
        %v1546 = vpack.c.bf16 %v1545, %v1545
        %1547 = vrot.lane.b32.xlu0 %v1404, 80
        %v1548 = vpop.permute.xlu0 %1547
        %v1551 = vsel %vm1254, %v1546, 0
        %1553 = vmatpush.bf16.msra.mxu0 0
        %1554 = vmatpush.bf16.msra.mxu0 0
        %1555 = vmatpush.bf16.msra.mxu0 0
        %1556 = vmatpush.bf16.msra.mxu0 0
        %1557 = vmatpush.bf16.msra.mxu0 0
        %1558 = vmatpush.bf16.msra.mxu0 0
        %1559 = vmatpush.bf16.msra.mxu0 0
        %1560 = vmatpush.bf16.msra.mxu0 %v1548
        %1561 = vmatmul.bf16.gmra.mxu0 %v1551
        %v1562 = vpop.f32.mrf.mxu0
        %v1563 = vadd.f32 0.0, %v1562
        %v1564 = vpop.f32.mrf.mxu0
        %1565 = vdwg.mxu0
        %1566 = vrot.lane.b32.xlu0 %v1457, 104
        %v1567 = vpop.permute.xlu0 %1566
        %1568 = vrot.lane.b32.xlu0 %v1404, 104
        %v1569 = vpop.permute.xlu0 %1568
        %v1571 = vsel %vm1013, %v1567, 0
        %v1574 = vsel %vm1013, %v1569, 0
        %1576 = vmatpush.bf16.xpose.msra.mxu0 0
        %1577 = vmatpush.bf16.xpose.msra.mxu0 0
        %1578 = vmatpush.bf16.xpose.msra.mxu0 0
        %1579 = vmatpush.bf16.xpose.msra.mxu0 0
        %1580 = vmatpush.bf16.xpose.msra.mxu0 0
        %1581 = vmatpush.bf16.xpose.msra.mxu0 0
        %1582 = vmatpush.bf16.xpose.msra.mxu0 0
        %1583 = vmatpush.bf16.xpose.msra.mxu0 %v1574
        %1584 = vmatmul.bf16.gmra.mxu0 %v1571
        %v1585 = vpop.f32.mrf.mxu0
        %v1586 = vadd.f32 %v901, %v1585
        %v1587 = vpop.f32.mrf.mxu0
        %1588 = vdwg.mxu0
        %v1589 = vsel %vm1254, %v1586, -inf
        %1590 = vmax.xlane.f32.xlu0 %v1589
        %v1591 = vpop.xlane.xlu0 %1590
        %v1592 = vsub.f32 %v1586, %v1591
        %v1593 = vmul.f32 %v1592, 1.442695
        %v1594 = vpow.pop %v1593
        %v1595 = vsel %vm1254, %v1594, 0.0
        %1596 = vadd.xlane.f32.xlu0 %v1595
        %v1597 = vpop.xlane.xlu0 %1596
        %v1598 = vrcp.pop %v1597
        %v1599 = vmul.f32 %v1594, %v1598
        %v1600 = vpack.c.bf16 %v1599, %v1599
        %1601 = vrot.lane.b32.xlu0 %v1404, 72
        %v1602 = vpop.permute.xlu0 %1601
        %v1605 = vsel %vm1254, %v1600, 0
        %1607 = vmatpush.bf16.msra.mxu0 0
        %1608 = vmatpush.bf16.msra.mxu0 0
        %1609 = vmatpush.bf16.msra.mxu0 0
        %1610 = vmatpush.bf16.msra.mxu0 0
        %1611 = vmatpush.bf16.msra.mxu0 0
        %1612 = vmatpush.bf16.msra.mxu0 0
        %1613 = vmatpush.bf16.msra.mxu0 0
        %1614 = vmatpush.bf16.msra.mxu0 %v1602
        %1615 = vmatmul.bf16.gmra.mxu0 %v1605
        %v1616 = vpop.f32.mrf.mxu0
        %v1617 = vadd.f32 0.0, %v1616
        %v1618 = vpop.f32.mrf.mxu0
        %1619 = vdwg.mxu0
        %1621 = vrot.lane.b32.xlu0 %v1509, 8
        %v1622 = vpop.permute.xlu0 %1621
        %1625 = vrot.lane.b32.xlu0 %v1563, 16
        %v1626 = vpop.permute.xlu0 %1625
        %1629 = vrot.lane.b32.xlu0 %v1617, 24
        %v1630 = vpop.permute.xlu0 %1629
        %v1632 = vsel %vm1013, %v1452, %v1622
        %v1633 = vsel %vm1254, %v1632, %v1626
        %v1634 = vsel %vm1256, %v1633, %v1630
        %v1635 = vpack.c.bf16 %v1634, %v1634
        %v1637 = vperm.slane %v1331, 0
        %v1643 = vunpack.c.l.b16 %v1327
        %v1644 = vunpack.c.l.b16 %v1328
        %v1645 = vunpack.c.l.b16 %v1329
        %v1646 = vunpack.c.l.b16 %v1330
        %v1647 = vpack.c.b16 %v1644, %v1643
        %v1648 = vpack.c.b16 %v1646, %v1645
        %v1652 = vsel %vm902, %v1635, 0
        %1654 = vmatpush.bf16.msra.mxu0 0
        %1655 = vmatpush.bf16.msra.mxu0 0
        %1656 = vmatpush.bf16.msra.mxu0 0
        %1657 = vmatpush.bf16.msra.mxu0 0
        %1658 = vmatpush.bf16.msra.mxu0 0
        %1659 = vmatpush.bf16.msra.mxu0 0
        %1660 = vmatpush.bf16.msra.mxu0 %v1648
        %1661 = vmatpush.bf16.msra.mxu0 %v1647
        %1662 = vmatmul.bf16.gmra.mxu0 %v1652
        %v1663 = vpop.f32.mrf.mxu0
        %v1664 = vadd.f32 %v1637, %v1663
        %v1665 = vpop.f32.mrf.mxu0
        %1666 = vdwg.mxu0
        %v1667 = vadd.f32 %v1664, %v1290
        %v1668 = vsel %vm902, %v1667, 0.0
        %1669 = vadd.xlane.f32.xlu0 %v1668
        %v1670 = vpop.xlane.xlu0 %1669
        %v1671 = vmul.f32 %v1670, %v912
        %v1672 = vsub.f32 %v1667, %v1671
        %v1673 = vmul.f32 %v1672, %v1672
        %v1674 = vsel %vm902, %v1673, 0.0
        %1675 = vadd.xlane.f32.xlu0 %v1674
        %v1676 = vpop.xlane.xlu0 %1675
        %v1677 = vmul.f32 %v1676, %v912
        %v1678 = vadd.f32 %v1677, 1e-06
        %v1679 = vrsqrt.pop %v1678
        %v1680 = vmul.f32 %v1679, %v1678
        %v1681 = vmul.f32 %v1680, %v1679
        %v1682 = vmul.f32 0.5, %v1681
        %v1683 = vsub.f32 1.5, %v1682
        %v1684 = vmul.f32 %v1679, %v1683
        %vm1685 = vweird.f32 %v1678
        %vm1686 = vweird.f32 %v1679
        %vm1687 = vmor %vm1685, %vm1686
        %v1688 = vsel %vm1687, %v1679, %v1684
        %v1689 = vmul.f32 %v1672, %v1688
        %v1690 = vperm.slane %v890, 2
        %v1691 = vmul.f32 %v1689, %v1690
        %v1692 = vperm.slane %v891, 2
        %v1693 = vadd.f32 %v1691, %v1692
        %v1694 = vpack.c.bf16 %v1693, %v1693
        %v1695 = vld [vmem:[#allocation25] sm:$0xf]
        %v1696 = vld [vmem:[#allocation25 + $0x4] sm:$0xf]
        %v1697 = vld [vmem:[#allocation25 + $0x8] sm:$0xf]
        %v1698 = vld [vmem:[#allocation25 + $0xc] sm:$0xf]
        %v1699 = vld [vmem:[#allocation27] sm:$0x1]
        %v1701 = vperm.slane %v1699, 0
        %v1707 = vunpack.c.l.b16 %v1695
        %v1708 = vunpack.c.l.b16 %v1696
        %v1709 = vunpack.c.l.b16 %v1697
        %v1710 = vunpack.c.l.b16 %v1698
        %v1711 = vpack.c.b16 %v1708, %v1707
        %v1712 = vpack.c.b16 %v1710, %v1709
        %v1716 = vsel %vm902, %v1694, 0
        %1718 = vmatpush.bf16.msra.mxu0 0
        %1719 = vmatpush.bf16.msra.mxu0 0
        %1720 = vmatpush.bf16.msra.mxu0 0
        %1721 = vmatpush.bf16.msra.mxu0 0
        %1722 = vmatpush.bf16.msra.mxu0 0
        %1723 = vmatpush.bf16.msra.mxu0 0
        %1724 = vmatpush.bf16.msra.mxu0 %v1712
        %1725 = vmatpush.bf16.msra.mxu0 %v1711
        %1726 = vmatmul.bf16.gmra.mxu0 %v1716
        %v1727 = vpop.f32.mrf.mxu0
        %v1728 = vadd.f32 %v1701, %v1727
        %v1729 = vpop.f32.mrf.mxu0
        %1730 = vdwg.mxu0
        %v1731 = vmax.f32 %v1728, 0.0
        %v1732 = vpack.c.bf16 %v1731, %v1731
        %v1733 = vld [vmem:[%s19] sm:$0xf]
        %v1734 = vld [vmem:[%s19 + $0x4] sm:$0xf]
        %v1735 = vld [vmem:[%s19 + $0x8] sm:$0xf]
        %v1736 = vld [vmem:[%s19 + $0xc] sm:$0xf]
        %v1737 = vld [vmem:[%s19 + $0x10] sm:$0xf]
        %v1738 = vld [vmem:[%s19 + $0x14] sm:$0xf]
        %v1739 = vld [vmem:[%s19 + $0x18] sm:$0xf]
        %v1740 = vld [vmem:[%s19 + $0x1c] sm:$0xf]
        %v1741 = vld [vmem:[%s20] sm:$0x1]
        %v1743 = vperm.slane %v1741, 0
        %v1753 = vunpack.c.l.b16 %v1733
        %v1754 = vunpack.c.l.b16 %v1734
        %v1755 = vunpack.c.l.b16 %v1735
        %v1756 = vunpack.c.l.b16 %v1736
        %v1757 = vunpack.c.l.b16 %v1737
        %v1758 = vunpack.c.l.b16 %v1738
        %v1759 = vunpack.c.l.b16 %v1739
        %v1760 = vunpack.c.l.b16 %v1740
        %v1761 = vpack.c.b16 %v1754, %v1753
        %v1762 = vpack.c.b16 %v1756, %v1755
        %v1763 = vpack.c.b16 %v1758, %v1757
        %v1764 = vpack.c.b16 %v1760, %v1759
        %vm1769 = vcmask 523264
        %v1771 = vsel %vm1769, %v1732, 0
        %1773 = vmatpush.bf16.msra.mxu0 0
        %1774 = vmatpush.bf16.msra.mxu0 0
        %1775 = vmatpush.bf16.msra.mxu0 0
        %1776 = vmatpush.bf16.msra.mxu0 0
        %1777 = vmatpush.bf16.msra.mxu0 %v1764
        %1778 = vmatpush.bf16.msra.mxu0 %v1763
        %1779 = vmatpush.bf16.msra.mxu0 %v1762
        %1780 = vmatpush.bf16.msra.mxu0 %v1761
        %1781 = vmatmul.bf16.gmra.mxu0 %v1771
        %v1782 = vpop.f32.mrf.mxu0
        %v1783 = vadd.f32 %v1743, %v1782
        %v1784 = vpop.f32.mrf.mxu0
        %1785 = vdwg.mxu0
        %v1786 = vadd.f32 %v1783, %v1667
        %1787 = vst.msk [vmem:[%s876] sm:$0xff] %vm902, %v1786
        %s1788 = sand.u32 %s489, 1
        %s1789 = scalar_lea.sflag [#allocation6], %s1788
        %s1790 = sand.u32 %s489, 1
        %s1791 = smul.addr %s1790, 8
        %s1792 = scalar_lea.vmem [#allocation28], %s1791
        // Predicated region
        $region161: #{tpu_custom_call.1} parent=99 // pred_check
          %p1793 = pneg %p499
        $region162: #{tpu_custom_call.1} parent=99 // pred_check_branch
          %1795 = sbr.rel (%p1793) target = $region164
        $region163: #{tpu_custom_call.1} parent=99 // pred_region
          %1797 = vsyncadd %s1789, 0
          %s1798 = smul.addr %s51, 8
          %s1799 = scalar_lea.hbm %s21, %s1798
          %s1801 = sshll.u32 %s1792, 4
          %s1802 = int_to_ptr.vmem [resolvable:$true] %s1801
          %s1803 = sshll.u32 %s1799, 4
          %s1804 = int_to_ptr.hbm [resolvable:$true] %s1803
          %1806 = dma.vmem_to_hbm [thread:$0]  %s1802, 128, %s1804, %s1789
        $region164: #{tpu_custom_call.1} parent=99 // pred_fallthru
          _
      $region100: #{tpu_custom_call.1} parent=5 // pred_fallthru
        _
      %p1807 = scmp.le.s32.totalorder 2, %s46
      // Predicated region
      $region165: #{tpu_custom_call.1} parent=5 // pred_check
        %p1808 = pneg %p1807
      $region166: #{tpu_custom_call.1} parent=5 // pred_check_branch
        %1810 = sbr.rel (%p1808) target = $region168
      $region167: #{tpu_custom_call.1} parent=5 // pred_region
        %s1811 = ssub.s32 %s46, 2
        // Predicated region
        $region169: #{tpu_custom_call.1} parent=167 // pred_check
          %p1812 = pneg %p505
        $region170: #{tpu_custom_call.1} parent=167 // pred_check_branch
          %1814 = sbr.rel (%p1812) target = $region172
        $region171: #{tpu_custom_call.1} parent=167 // pred_region
          %s1815 = sand.u32 %s490, 1
          %s1816 = scalar_lea.sflag [#allocation6], %s1815
          %s1817 = sand.u32 %s490, 1
          %s1818 = smul.addr %s1817, 8
          %s1819 = scalar_lea.vmem [#allocation28], %s1818
          %1821 = dma.done %s1816, 128
        $region172: #{tpu_custom_call.1} parent=167 // pred_fallthru
          _
      $region168: #{tpu_custom_call.1} parent=5 // pred_fallthru
        _
    $region6: #{tpu_custom_call.1} parent=1 // loop_footer
      %s50 = sadd.s32 1, %s46
    $region7: #{tpu_custom_call.1} parent=1 // loop_footer_branch
      %45 = sbr.rel target = $region3
    $region8: #{tpu_custom_call.1} parent=1 // loop_exit
      _
    %1822 = vsyncpa [#allocation5], 1
    %s1823 = scalar_lea.sflag [#allocation5], 1
    %1824 = vsyncpa %s1823, 1
    %1825 = vsyncpa [#allocation8], 1
    %1826 = vsyncpa [#allocation11], 1
    %1827 = vsyncpa [#allocation14], 1
    %1828 = vsyncpa [#allocation17], 1
    %1829 = vsyncpa [#allocation20], 1
    %1830 = vsyncpa [#allocation23], 1
    %1831 = vsyncpa [#allocation26], 1
    %1832 = vsyncpa [#allocation6], 1
    %s1833 = scalar_lea.sflag [#allocation6], 1
    %1834 = vsyncpa %s1833, 1

</llo_original>
